<compile_context>
chip_gen: v6e
topology: v6e:2x2x1
jax: 0.10.0
libtpu: 0.0.40
codegen_flags: <defaults>
</compile_context>

<pallas_src>
import functools

import jax
import jax.numpy as jnp
from jax.experimental import pallas as pl
from jax.experimental.pallas import tpu as pltpu

LANES = 128  # MLP hidden widths are zero-padded to this lane width.


def _round_up(x, m):
    return (x + m - 1) // m * m


# ----------------------------------------------------------------------------
# Pallas kernel: everything after the embedding gathers (per batch tile).
# ----------------------------------------------------------------------------
def deepfm_kernel(
    vflat_ref,          # (TB, F*E)    bf16 flattened embedded features
    psum_ref,           # (TB, 1)      f32  pre-reduced first-order term
    rhs1_ref,           # (F*E, 256)   bf16 [field-sum matrix | w1] fused RHS
    b1_ref,             # (1, 128)     f32
    w2_ref, b2_ref,     # (128, 128) bf16, (1, 128) f32
    w3_ref, b3_ref,     # (128, 128) bf16, (1, 128) f32
    w4_ref,             # (1, 128)     f32  (last Linear as a row vector)
    scal_ref,           # (3,) f32 in SMEM: [fc_w, fc_b, b4]
    out_ref,            # (TB, 1) f32
):
    v16 = vflat_ref[...]                       # bf16 (TB, F*E)
    v32 = v16.astype(jnp.float32)

    # ---- Fused [field-sum | layer-1] matmul: one N=256 MXU pass ----
    r = jnp.dot(v16, rhs1_ref[...], preferred_element_type=jnp.float32)   # (TB,256)
    s = r[:, :LANES]          # (TB,128): s[:, e] = sum_f v[:, f, e]; lanes >= E are 0
    h1_pre = r[:, LANES:]     # (TB,128): first MLP pre-activation (no bias yet)

    # ---- FM second-order interaction ----
    sq_sum = jnp.sum(v32 * v32, axis=-1, keepdims=True)                   # (TB,1)
    fm_int = 0.5 * (jnp.sum(s * s, axis=-1, keepdims=True) - sq_sum)      # (TB,1)

    # ---- fc: Linear(1, 1) on (fm_proj + fm_int), scalars from SMEM ----
    fc_w = scal_ref[0]
    fc_b = scal_ref[1]
    b4 = scal_ref[2]
    fm_logit = (psum_ref[...] + fm_int) * fc_w + fc_b                     # (TB,1)

    # ---- MLP (dropout = identity at inference) ----
    h = jnp.maximum(h1_pre + b1_ref[...], 0.0).astype(jnp.bfloat16)
    h = jnp.maximum(
        jnp.dot(h, w2_ref[...], preferred_element_type=jnp.float32) + b2_ref[...],
        0.0).astype(jnp.bfloat16)
    h3 = jnp.maximum(
        jnp.dot(h, w3_ref[...], preferred_element_type=jnp.float32) + b3_ref[...],
        0.0)                                                              # f32 (TB,128)
    # Last Linear(10,1) as elementwise mul + lane reduce (padded lanes are 0).
    mlp_logit = jnp.sum(h3 * w4_ref[...], axis=-1, keepdims=True) + b4    # (TB,1)

    out_ref[...] = jax.nn.sigmoid(fm_logit + mlp_logit)


# ----------------------------------------------------------------------------
# Wrapper: embedding gathers (glue) + batch-tiled pallas_call.
# ----------------------------------------------------------------------------
@functools.partial(jax.jit, static_argnames=("tile_b",))
def deepfm_forward(x, packed, tile_b=4096):
    """x: (B, F) int32 indices into the shared feature vocabulary."""
    emb = packed["embedding"]                # (num_inputs, E) bf16
    E = emb.shape[1]
    B, F = x.shape
    FE = F * E

    # Embedding gathers stay in plain JAX (data-dependent gather); the
    # first-order term is reduced here so only 4 B/row reach the kernel.
    vflat = jnp.take(emb, x, axis=0).reshape(B, FE)                       # (B, F*E) bf16
    psum = jnp.sum(jnp.take(packed["proj"], x, axis=0)[..., 0],
                   axis=-1, keepdims=True)                                # (B, 1) f32

    # Batch tiling: big tiles to amortize per-step overhead, but capped at
    # ceil(B/2) so the grid has >= 2 steps (v7x megacore sharding).
    tb = max(8, _round_up(min(tile_b, (B + 1) // 2), 8))
    B_pad = _round_up(B, tb)
    if B_pad != B:
        vflat = jnp.pad(vflat, ((0, B_pad - B), (0, 0)))
        psum = jnp.pad(psum, ((0, B_pad - B), (0, 0)))
    grid = (B_pad // tb,)

    out = pl.pallas_call(
        deepfm_kernel,
        out_shape=jax.ShapeDtypeStruct((B_pad, 1), jnp.float32),
        grid=grid,
        in_specs=[
            pl.BlockSpec((tb, FE), lambda i: (i, 0)),           # vflat (tiled)
            pl.BlockSpec((tb, 1), lambda i: (i, 0)),            # psum  (tiled)
            pl.BlockSpec((FE, 2 * LANES), lambda i: (0, 0)),    # fused [ssum|w1]
            pl.BlockSpec((1, LANES), lambda i: (0, 0)),         # b1
            pl.BlockSpec((LANES, LANES), lambda i: (0, 0)),     # w2
            pl.BlockSpec((1, LANES), lambda i: (0, 0)),         # b2
            pl.BlockSpec((LANES, LANES), lambda i: (0, 0)),     # w3
            pl.BlockSpec((1, LANES), lambda i: (0, 0)),         # b3
            pl.BlockSpec((1, LANES), lambda i: (0, 0)),         # w4 row
            pl.BlockSpec(memory_space=pltpu.MemorySpace.SMEM),  # [fc_w, fc_b, b4]
        ],
        out_specs=pl.BlockSpec((tb, 1), lambda i: (i, 0)),
        compiler_params=pltpu.CompilerParams(
            dimension_semantics=("parallel",),
            vmem_limit_bytes=48 * 1024 * 1024),
    )(
        vflat, psum,
        packed["rhs1"], packed["b1"],
        packed["w2"], packed["b2"],
        packed["w3"], packed["b3"],
        packed["w4row"],
        packed["scalars"],
    )
    return out[:B, 0]                                                     # (B,)


# ----------------------------------------------------------------------------
# Parameter construction + packing (padding / dtype / layout).
# ----------------------------------------------------------------------------
def init_params(key, feat_dims, embedding_dims, mlp_dims):
    """Torch-shaped logical parameters (f32), xavier-normal-ish."""
    num_inputs = int(sum(feat_dims))
    F = len(feat_dims)
    dims = [F * embedding_dims] + list(mlp_dims) + [1]   # [F*E, 30, 20, 10, 1]

    def xavier(k, fan_in, fan_out, shape):
        std = (2.0 / (fan_in + fan_out)) ** 0.5
        return std * jax.random.normal(k, shape, dtype=jnp.float32)

    keys = jax.random.split(key, 16)
    params = {
        "embedding": xavier(keys[0], num_inputs, embedding_dims,
                            (num_inputs, embedding_dims)),
        "proj": xavier(keys[1], num_inputs, 1, (num_inputs, 1)),
        "fc_w": xavier(keys[2], 1, 1, (1, 1)),
        "fc_b": 0.01 * jax.random.normal(keys[3], (1, 1), dtype=jnp.float32),
    }
    # MLP weights stored pre-transposed: (in, out) so the kernel does x @ W.
    for i in range(4):
        d_in, d_out = dims[i], dims[i + 1]
        params[f"w{i+1}"] = xavier(keys[4 + 2 * i], d_in, d_out, (d_in, d_out))
        params[f"b{i+1}"] = 0.01 * jax.random.normal(
            keys[5 + 2 * i], (1, d_out), dtype=jnp.float32)
    return params


def pack_params(params, num_fields, embedding_dims):
    """Pad MLP widths to 128 lanes, cast to bf16, fuse field-sum matrix + w1."""
    F, E = num_fields, embedding_dims
    FE = F * E
    assert E <= LANES

    def pad2(w, rows, cols):
        return jnp.pad(w, ((0, rows - w.shape[0]), (0, cols - w.shape[1])))

    # Field-sum matrix: (vflat @ ssum)[:, e] = sum_f v[:, f, e]; extra lanes 0.
    ssum = jnp.tile(jnp.eye(E, dtype=jnp.float32), (F, 1))      # (F*E, E)
    ssum = jnp.pad(ssum, ((0, 0), (0, LANES - E)))              # (F*E, 128)
    w1p = pad2(params["w1"], FE, LANES)                         # (F*E, 128)
    rhs1 = jnp.concatenate([ssum, w1p], axis=1).astype(jnp.bfloat16)  # (F*E, 256)

    return {
        "embedding": params["embedding"].astype(jnp.bfloat16),
        "proj": params["proj"].astype(jnp.float32),
        "rhs1": rhs1,
        "b1": pad2(params["b1"], 1, LANES).astype(jnp.float32),
        "w2": pad2(params["w2"], LANES, LANES).astype(jnp.bfloat16),
        "b2": pad2(params["b2"], 1, LANES).astype(jnp.float32),
        "w3": pad2(params["w3"], LANES, LANES).astype(jnp.bfloat16),
        "b3": pad2(params["b3"], 1, LANES).astype(jnp.float32),
        "w4row": pad2(params["w4"].T, 1, LANES).astype(jnp.float32),
        "scalars": jnp.array(
            [params["fc_w"][0, 0], params["fc_b"][0, 0], params["b4"][0, 0]],
            dtype=jnp.float32),
    }


# ----------------------------------------------------------------------------
# References for validation.
# ----------------------------------------------------------------------------
def deepfm_reference(x, packed):
    """Pure-JAX reference mirroring the kernel's dtype policy exactly."""
    emb = packed["embedding"]
    E = emb.shape[1]
    B, F = x.shape
    v16 = jnp.take(emb, x, axis=0).reshape(B, F * E)            # bf16
    v32 = v16.astype(jnp.float32)
    psum = jnp.sum(jnp.take(packed["proj"], x, axis=0)[..., 0],
                   axis=-1, keepdims=True)

    r = jnp.dot(v16, packed["rhs1"], preferred_element_type=jnp.float32)
    s, h1_pre = r[:, :LANES], r[:, LANES:]
    sq_sum = jnp.sum(v32 * v32, axis=-1, keepdims=True)
    fm_int = 0.5 * (jnp.sum(s * s, axis=-1, keepdims=True) - sq_sum)
    fc_w, fc_b, b4 = packed["scalars"]
    fm_logit = (psum + fm_int) * fc_w + fc_b

    h = jnp.maximum(h1_pre + packed["b1"], 0.0).astype(jnp.bfloat16)
    h = jnp.maximum(
        jnp.dot(h, packed["w2"], preferred_element_type=jnp.float32) + packed["b2"],
        0.0).astype(jnp.bfloat16)
    h3 = jnp.maximum(
        jnp.dot(h, packed["w3"], preferred_element_type=jnp.float32) + packed["b3"],
        0.0)
    mlp_logit = jnp.sum(h3 * packed["w4row"], axis=-1, keepdims=True) + b4
    return jax.nn.sigmoid(fm_logit + mlp_logit)[:, 0]


def deepfm_reference_f32(x, params):
    """Full-f32 reference (torch semantics) — loose sanity check for bf16 path."""
    v = jnp.take(params["embedding"], x, axis=0)
    p = jnp.take(params["proj"], x, axis=0)[..., 0]
    fm_int = 0.5 * jnp.sum(jnp.sum(v, 1) ** 2 - jnp.sum(v ** 2, 1),
                           axis=-1, keepdims=True)
    fm_proj = jnp.sum(p, axis=-1, keepdims=True)
    fm_logit = (fm_proj + fm_int) * params["fc_w"][0, 0] + params["fc_b"][0, 0]
    h = v.reshape(v.shape[0], -1)
    for i in (1, 2, 3):
        h = jnp.maximum(h @ params[f"w{i}"] + params[f"b{i}"], 0.0)
    mlp_logit = h @ params["w4"] + params["b4"]
    return jax.nn.sigmoid(fm_logit + mlp_logit)[:, 0]


if __name__ == "__main__":
    # Small DeepFM config: 4 feature fields, embedding dim 8, MLP [30, 20, 10].
    feat_dims = [10, 20, 30, 40]
    embedding_dims = 8
    mlp_dims = [30, 20, 10]
    B = 256
    F = len(feat_dims)
    num_inputs = int(sum(feat_dims))

    key = jax.random.PRNGKey(0)
    k_param, k_x = jax.random.split(key)
    params = init_params(k_param, feat_dims, embedding_dims, mlp_dims)
    packed = pack_params(params, F, embedding_dims)

    # Input indices into the shared vocabulary (as the torch module expects).
    x = jax.random.randint(k_x, (B, F), 0, num_inputs, dtype=jnp.int32)

    # Default tiling: tb = min(4096, ceil(B/2)) = 128 -> grid=(2,), so the
    # batch pipeline and the 2-step megacore split are actually exercised.
    out = deepfm_forward(x, packed)
    out = jax.block_until_ready(out)

    ref = deepfm_reference(x, packed)
    ref_f32 = deepfm_reference_f32(x, params)
    assert out.shape == (B,)
    assert jnp.allclose(out, ref, atol=1e-4, rtol=1e-4), (
        "mismatch vs bf16-mirrored reference:",
        float(jnp.max(jnp.abs(out - ref))))
    assert jnp.allclose(out, ref_f32, atol=5e-2), (
        "mismatch vs f32 torch-semantics reference:",
        float(jnp.max(jnp.abs(out - ref_f32))))

    print("KERNEL_OK")
</pallas_src>

<mosaic_0001>
module attributes {stable_mosaic.version = 11 : i64} {
  func.func @deepfm_kernel(%arg0: i32, %arg1: memref<128x32xbf16, #tpu.memory_space<vmem>>, %arg2: memref<128x1xf32, #tpu.memory_space<vmem>>, %arg3: memref<32x256xbf16, #tpu.memory_space<vmem>>, %arg4: memref<1x128xf32, #tpu.memory_space<vmem>>, %arg5: memref<128x128xbf16, #tpu.memory_space<vmem>>, %arg6: memref<1x128xf32, #tpu.memory_space<vmem>>, %arg7: memref<128x128xbf16, #tpu.memory_space<vmem>>, %arg8: memref<1x128xf32, #tpu.memory_space<vmem>>, %arg9: memref<1x128xf32, #tpu.memory_space<vmem>>, %arg10: memref<3xf32, #tpu.memory_space<smem>>, %arg11: memref<128x1xf32, #tpu.memory_space<vmem>>) attributes {dimension_semantics = [#tpu.dimension_semantics<parallel>], iteration_bounds = array<i64: 2>, scalar_prefetch = 0 : i64, scratch_operands = 0 : i64, tpu.core_type = #tpu.core_type<tc>, window_params = [{transform_indices = @transform_0, window_bounds = array<i64: 128, 32>}, {transform_indices = @transform_1, window_bounds = array<i64: 128, 1>}, {pipeline_mode = #tpu.pipeline_mode<synchronous>, transform_indices = @transform_2, window_bounds = array<i64: 32, 256>}, {pipeline_mode = #tpu.pipeline_mode<synchronous>, transform_indices = @transform_3, window_bounds = array<i64: 1, 128>}, {pipeline_mode = #tpu.pipeline_mode<synchronous>, transform_indices = @transform_4, window_bounds = array<i64: 128, 128>}, {pipeline_mode = #tpu.pipeline_mode<synchronous>, transform_indices = @transform_5, window_bounds = array<i64: 1, 128>}, {pipeline_mode = #tpu.pipeline_mode<synchronous>, transform_indices = @transform_6, window_bounds = array<i64: 128, 128>}, {pipeline_mode = #tpu.pipeline_mode<synchronous>, transform_indices = @transform_7, window_bounds = array<i64: 1, 128>}, {pipeline_mode = #tpu.pipeline_mode<synchronous>, transform_indices = @transform_8, window_bounds = array<i64: 1, 128>}, {transform_indices = @transform_9, window_bounds = array<i64: 3>}, {transform_indices = @transform_10, window_bounds = array<i64: 128, 1>}]} {
    %c0 = arith.constant 0 : index
    %c0_0 = arith.constant 0 : index
    %0 = vector.load %arg1[%c0, %c0_0] : memref<128x32xbf16, #tpu.memory_space<vmem>>, vector<128x32xbf16>
    %1 = arith.extf %0 : vector<128x32xbf16> to vector<128x32xf32>
    %c0_1 = arith.constant 0 : index
    %c0_2 = arith.constant 0 : index
    %2 = vector.load %arg3[%c0_1, %c0_2] : memref<32x256xbf16, #tpu.memory_space<vmem>>, vector<32x256xbf16>
    %cst = arith.constant dense<0.000000e+00> : vector<128x256xf32>
    %3 = tpu.matmul %0, %2, %cst {dimension_numbers = #tpu.dot_dimension_numbers<[1], [0], [0], [1], [0, 0, 1, 1], [], []>} : vector<128x32xbf16>, vector<32x256xbf16>, vector<128x256xf32> -> vector<128x256xf32>
    %4 = vector.extract_strided_slice %3 {offsets = [0, 0], sizes = [128, 128], strides = [1, 1]} : vector<128x256xf32> to vector<128x128xf32>
    %5 = vector.extract_strided_slice %3 {offsets = [0, 128], sizes = [128, 128], strides = [1, 1]} : vector<128x256xf32> to vector<128x128xf32>
    %6 = arith.mulf %1, %1 : vector<128x32xf32>
    %cst_3 = arith.constant dense<0.000000e+00> : vector<128xf32>
    %7 = vector.multi_reduction <add>, %6, %cst_3 [1] : vector<128x32xf32> to vector<128xf32>
    %8 = vector.shape_cast %7 : vector<128xf32> to vector<128x1xf32>
    %9 = arith.mulf %4, %4 : vector<128x128xf32>
    %cst_4 = arith.constant dense<0.000000e+00> : vector<128xf32>
    %10 = vector.multi_reduction <add>, %9, %cst_4 [1] : vector<128x128xf32> to vector<128xf32>
    %11 = vector.shape_cast %10 : vector<128xf32> to vector<128x1xf32>
    %12 = arith.subf %11, %8 : vector<128x1xf32>
    %cst_5 = arith.constant 5.000000e-01 : f32
    %13 = vector.broadcast %cst_5 : f32 to vector<128x1xf32>
    %14 = arith.mulf %13, %12 : vector<128x1xf32>
    %c0_6 = arith.constant 0 : index
    %15 = memref.load %arg10[%c0_6] : memref<3xf32, #tpu.memory_space<smem>>
    %c1 = arith.constant 1 : index
    %16 = memref.load %arg10[%c1] : memref<3xf32, #tpu.memory_space<smem>>
    %c2 = arith.constant 2 : index
    %17 = memref.load %arg10[%c2] : memref<3xf32, #tpu.memory_space<smem>>
    %c0_7 = arith.constant 0 : index
    %c0_8 = arith.constant 0 : index
    %18 = vector.load %arg2[%c0_7, %c0_8] : memref<128x1xf32, #tpu.memory_space<vmem>>, vector<128x1xf32>
    %19 = arith.addf %18, %14 : vector<128x1xf32>
    %20 = vector.broadcast %15 : f32 to vector<128x1xf32>
    %21 = arith.mulf %19, %20 : vector<128x1xf32>
    %22 = vector.broadcast %16 : f32 to vector<128x1xf32>
    %23 = arith.addf %21, %22 : vector<128x1xf32>
    %c0_9 = arith.constant 0 : index
    %c0_10 = arith.constant 0 : index
    %24 = vector.load %arg4[%c0_9, %c0_10] : memref<1x128xf32, #tpu.memory_space<vmem>>, vector<1x128xf32>
    %25 = vector.broadcast %24 : vector<1x128xf32> to vector<128x128xf32>
    %26 = arith.addf %5, %25 : vector<128x128xf32>
    %cst_11 = arith.constant 0.000000e+00 : f32
    %27 = vector.broadcast %cst_11 : f32 to vector<128x128xf32>
    %28 = arith.maximumf %26, %27 : vector<128x128xf32>
    %29 = arith.truncf %28 : vector<128x128xf32> to vector<128x128xbf16>
    %c0_12 = arith.constant 0 : index
    %c0_13 = arith.constant 0 : index
    %30 = vector.load %arg5[%c0_12, %c0_13] : memref<128x128xbf16, #tpu.memory_space<vmem>>, vector<128x128xbf16>
    %cst_14 = arith.constant dense<0.000000e+00> : vector<128x128xf32>
    %31 = tpu.matmul %29, %30, %cst_14 {dimension_numbers = #tpu.dot_dimension_numbers<[1], [0], [0], [1], [0, 0, 1, 1], [], []>} : vector<128x128xbf16>, vector<128x128xbf16>, vector<128x128xf32> -> vector<128x128xf32>
    %c0_15 = arith.constant 0 : index
    %c0_16 = arith.constant 0 : index
    %32 = vector.load %arg6[%c0_15, %c0_16] : memref<1x128xf32, #tpu.memory_space<vmem>>, vector<1x128xf32>
    %33 = vector.broadcast %32 : vector<1x128xf32> to vector<128x128xf32>
    %34 = arith.addf %31, %33 : vector<128x128xf32>
    %cst_17 = arith.constant 0.000000e+00 : f32
    %35 = vector.broadcast %cst_17 : f32 to vector<128x128xf32>
    %36 = arith.maximumf %34, %35 : vector<128x128xf32>
    %37 = arith.truncf %36 : vector<128x128xf32> to vector<128x128xbf16>
    %c0_18 = arith.constant 0 : index
    %c0_19 = arith.constant 0 : index
    %38 = vector.load %arg7[%c0_18, %c0_19] : memref<128x128xbf16, #tpu.memory_space<vmem>>, vector<128x128xbf16>
    %cst_20 = arith.constant dense<0.000000e+00> : vector<128x128xf32>
    %39 = tpu.matmul %37, %38, %cst_20 {dimension_numbers = #tpu.dot_dimension_numbers<[1], [0], [0], [1], [0, 0, 1, 1], [], []>} : vector<128x128xbf16>, vector<128x128xbf16>, vector<128x128xf32> -> vector<128x128xf32>
    %c0_21 = arith.constant 0 : index
    %c0_22 = arith.constant 0 : index
    %40 = vector.load %arg8[%c0_21, %c0_22] : memref<1x128xf32, #tpu.memory_space<vmem>>, vector<1x128xf32>
    %41 = vector.broadcast %40 : vector<1x128xf32> to vector<128x128xf32>
    %42 = arith.addf %39, %41 : vector<128x128xf32>
    %cst_23 = arith.constant 0.000000e+00 : f32
    %43 = vector.broadcast %cst_23 : f32 to vector<128x128xf32>
    %44 = arith.maximumf %42, %43 : vector<128x128xf32>
    %c0_24 = arith.constant 0 : index
    %c0_25 = arith.constant 0 : index
    %45 = vector.load %arg9[%c0_24, %c0_25] : memref<1x128xf32, #tpu.memory_space<vmem>>, vector<1x128xf32>
    %46 = vector.broadcast %45 : vector<1x128xf32> to vector<128x128xf32>
    %47 = arith.mulf %44, %46 : vector<128x128xf32>
    %cst_26 = arith.constant dense<0.000000e+00> : vector<128xf32>
    %48 = vector.multi_reduction <add>, %47, %cst_26 [1] : vector<128x128xf32> to vector<128xf32>
    %49 = vector.shape_cast %48 : vector<128xf32> to vector<128x1xf32>
    %50 = vector.broadcast %17 : f32 to vector<128x1xf32>
    %51 = arith.addf %49, %50 : vector<128x1xf32>
    %52 = arith.addf %23, %51 : vector<128x1xf32>
    %53 = arith.negf %52 : vector<128x1xf32>
    %54 = math.exp %53 : vector<128x1xf32>
    %cst_27 = arith.constant 1.000000e+00 : f32
    %55 = vector.broadcast %cst_27 : f32 to vector<128x1xf32>
    %56 = arith.addf %55, %54 : vector<128x1xf32>
    %57 = arith.divf %55, %56 : vector<128x1xf32>
    %c0_28 = arith.constant 0 : index
    %c0_29 = arith.constant 0 : index
    %58 = vector.load %arg11[%c0_28, %c0_29] : memref<128x1xf32, #tpu.memory_space<vmem>>, vector<128x1xf32>
    tpu.vector_store %arg11[%c0_28, %c0_29], %57 {strides = array<i32>} : memref<128x1xf32, #tpu.memory_space<vmem>>, vector<128x1xf32>,
    return
  }
  func.func @transform_0(%arg0: i32) -> (i32, i32) {
    %c0_i32 = arith.constant 0 : i32
    %c0_i32_0 = arith.constant 0 : i32
    return %arg0, %c0_i32 : i32, i32
  }
  func.func @transform_1(%arg0: i32) -> (i32, i32) {
    %c0_i32 = arith.constant 0 : i32
    %c0_i32_0 = arith.constant 0 : i32
    return %arg0, %c0_i32 : i32, i32
  }
  func.func @transform_2(%arg0: i32) -> (i32, i32) {
    %c0_i32 = arith.constant 0 : i32
    %c0_i32_0 = arith.constant 0 : i32
    %c0_i32_1 = arith.constant 0 : i32
    return %c0_i32, %c0_i32_0 : i32, i32
  }
  func.func @transform_3(%arg0: i32) -> (i32, i32) {
    %c0_i32 = arith.constant 0 : i32
    %c0_i32_0 = arith.constant 0 : i32
    %c0_i32_1 = arith.constant 0 : i32
    return %c0_i32, %c0_i32_0 : i32, i32
  }
  func.func @transform_4(%arg0: i32) -> (i32, i32) {
    %c0_i32 = arith.constant 0 : i32
    %c0_i32_0 = arith.constant 0 : i32
    %c0_i32_1 = arith.constant 0 : i32
    return %c0_i32, %c0_i32_0 : i32, i32
  }
  func.func @transform_5(%arg0: i32) -> (i32, i32) {
    %c0_i32 = arith.constant 0 : i32
    %c0_i32_0 = arith.constant 0 : i32
    %c0_i32_1 = arith.constant 0 : i32
    return %c0_i32, %c0_i32_0 : i32, i32
  }
  func.func @transform_6(%arg0: i32) -> (i32, i32) {
    %c0_i32 = arith.constant 0 : i32
    %c0_i32_0 = arith.constant 0 : i32
    %c0_i32_1 = arith.constant 0 : i32
    return %c0_i32, %c0_i32_0 : i32, i32
  }
  func.func @transform_7(%arg0: i32) -> (i32, i32) {
    %c0_i32 = arith.constant 0 : i32
    %c0_i32_0 = arith.constant 0 : i32
    %c0_i32_1 = arith.constant 0 : i32
    return %c0_i32, %c0_i32_0 : i32, i32
  }
  func.func @transform_8(%arg0: i32) -> (i32, i32) {
    %c0_i32 = arith.constant 0 : i32
    %c0_i32_0 = arith.constant 0 : i32
    %c0_i32_1 = arith.constant 0 : i32
    return %c0_i32, %c0_i32_0 : i32, i32
  }
  func.func @transform_9(%arg0: i32) -> i32 {
    %c0_i32 = arith.constant 0 : i32
    %c0_i32_0 = arith.constant 0 : i32
    return %c0_i32 : i32
  }
  func.func @transform_10(%arg0: i32) -> (i32, i32) {
    %c0_i32 = arith.constant 0 : i32
    %c0_i32_0 = arith.constant 0 : i32
    return %arg0, %c0_i32 : i32, i32
  }
}

</mosaic_0001>

<llo_original>
// kernel: deepfm_forward.1
$region0: #{deepfm_forward.1}
  #allocation0 [shape = 'u32[]', space=smem, size = 0x4, offset = 0x4, fixed_abs, tag = 'smem constant byte address 0x4 - core index']
  #allocation1 [shape = 'u32[144,128]{1,0:T(1,128)}', space=vmem, size = 0x12000, scoped, tag = 'internal scratch']
  %s0 = inlined_call_operand.vmem [shape: bf16[256,32], index: 0, kind: input, shape index: {}]
  %s1 = inlined_call_operand.vmem [shape: f32[256,1], index: 1, kind: input, shape index: {}]
  %s2 = inlined_call_operand.vmem [shape: bf16[32,256], index: 2, kind: input, shape index: {}]
  %s3 = inlined_call_operand.vmem [shape: f32[1,128], index: 3, kind: input, shape index: {}]
  %s4 = inlined_call_operand.vmem [shape: bf16[128,128], index: 4, kind: input, shape index: {}]
  %s5 = inlined_call_operand.vmem [shape: f32[1,128], index: 5, kind: input, shape index: {}]
  %s6 = inlined_call_operand.vmem [shape: bf16[128,128], index: 6, kind: input, shape index: {}]
  %s7 = inlined_call_operand.vmem [shape: f32[1,128], index: 7, kind: input, shape index: {}]
  %s8 = inlined_call_operand.vmem [shape: f32[1,128], index: 8, kind: input, shape index: {}]
  %s9 = inlined_call_operand.vmem [shape: f32[3], index: 9, kind: input, shape index: {}]
  %s10 = inlined_call_operand.vmem [shape: f32[256,1], index: 10, kind: output, shape index: {}]
  %s11 = sld [smem:[#allocation0]]
  $region77: #{deepfm_forward.1} parent=0
    _
  %s13 = ssub.s32 1, %s11
  %s14 = scalar_select 0, %s13, %s11
  $region1: #{deepfm_forward.1} parent=0
    #allocation2 [shape = 'u8[512]{0}', space=smem, size = 0x200, scoped, tag = 'input window, operand 9, single buffered']
    #allocation3 [shape = 's32[2]{0}', space=sflag, size = 0x8, scoped, tag = 'scoped memory for deepfm_forward.1']
    %15 = vsyncpa [#allocation3], 0
    loop: start=0, step=1, limit=4
    $region2: #{deepfm_forward.1} parent=1 // loop_pre_header
      _
    $region3: #{deepfm_forward.1} parent=1 // loop_header
      %s17 = sphi 0, %s21
      %p18 = scmp.ge.s32.totalorder %s17, 4
      %s27 = sphi 0, %s29
      %s30 = sphi 0, %s27
      %s31 = sphi 0, %s30
      %s47 = sphi 0, %s31
      %s53 = sphi 0, %s55
      %s56 = sphi 0, %s53
      %s57 = sphi 0, %s56
      %s73 = sphi 0, %s57
      %s77 = sphi 0, %s77
      %s79 = sphi 0, %s77
      %s80 = sphi 0, %s79
      %s94 = sphi 0, %s80
      %s98 = sphi 0, %s98
      %s100 = sphi 0, %s98
      %s101 = sphi 0, %s100
      %s115 = sphi 0, %s101
      %s119 = sphi 0, %s119
      %s121 = sphi 0, %s119
      %s122 = sphi 0, %s121
      %s136 = sphi 0, %s122
      %s140 = sphi 0, %s140
      %s142 = sphi 0, %s140
      %s143 = sphi 0, %s142
      %s157 = sphi 0, %s143
      %s161 = sphi 0, %s161
      %s163 = sphi 0, %s161
      %s164 = sphi 0, %s163
      %s178 = sphi 0, %s164
      %s182 = sphi 0, %s182
      %s184 = sphi 0, %s182
      %s185 = sphi 0, %s184
      %s199 = sphi 0, %s185
      %s203 = sphi 0, %s203
      %s205 = sphi 0, %s203
      %s206 = sphi 0, %s205
      %s220 = sphi 0, %s206
      %s224 = sphi 0, %s224
      %s226 = sphi 0, %s224
      %s227 = sphi 0, %s226
      %s241 = sphi 0, %s227
      %s247 = sphi 0, %s249
      %s250 = sphi 0, %s247
      %s251 = sphi 0, %s250
      %s267 = sphi 0, %s251
    $region4: #{deepfm_forward.1} parent=1 // loop_header_branch
      %20 = sbr.rel (%p18) target = $region8
    $region5: #{deepfm_forward.1} parent=1 // loop_body
      %s22 = ssub.s32 %s17, 1
      %s23 = ssub.s32 %s17, 2
      %s24 = sadd.s32 %s17, 1
      %s25 = ssub.s32 %s17, %s24
      %p26 = scmp.eq.s32.totalorder %s25, 0
      %s28 = sadd.s32 %s27, 1
      %s29 = scalar_select %p26, %s27, %s28
      %p32 = pneg %p26
      %p33 = scmp.eq.s32.totalorder %s17, 1
      %p34 = por %p32, %p33
      %p35 = scmp.ne.s32.totalorder %s27, %s30
      %p36 = scmp.eq.s32.totalorder %s17, 0
      %p37 = por %p35, %p36
      %p38 = scmp.ne.s32.totalorder %s27, %s30
      %p39 = scmp.eq.s32.totalorder %s22, 1
      %p40 = por %p38, %p39
      %p41 = scmp.ne.s32.totalorder %s30, %s31
      %p42 = scmp.eq.s32.totalorder %s22, 0
      %p43 = por %p41, %p42
      %p44 = scmp.ne.s32.totalorder %s30, %s31
      %p45 = scmp.eq.s32.totalorder %s23, 1
      %p46 = por %p44, %p45
      %p48 = scmp.ne.s32.totalorder %s31, %s47
      %p49 = scmp.eq.s32.totalorder %s23, 0
      %p50 = por %p48, %p49
      %s51 = ssub.s32 %s17, %s24
      %p52 = scmp.eq.s32.totalorder %s51, 0
      %s54 = sadd.s32 %s53, 1
      %s55 = scalar_select %p52, %s53, %s54
      %p58 = pneg %p52
      %p59 = scmp.eq.s32.totalorder %s17, 1
      %p60 = por %p58, %p59
      %p61 = scmp.ne.s32.totalorder %s53, %s56
      %p62 = scmp.eq.s32.totalorder %s17, 0
      %p63 = por %p61, %p62
      %p64 = scmp.ne.s32.totalorder %s53, %s56
      %p65 = scmp.eq.s32.totalorder %s22, 1
      %p66 = por %p64, %p65
      %p67 = scmp.ne.s32.totalorder %s56, %s57
      %p68 = scmp.eq.s32.totalorder %s22, 0
      %p69 = por %p67, %p68
      %p70 = scmp.ne.s32.totalorder %s56, %s57
      %p71 = scmp.eq.s32.totalorder %s23, 1
      %p72 = por %p70, %p71
      %p74 = scmp.ne.s32.totalorder %s57, %s73
      %p75 = scmp.eq.s32.totalorder %s23, 0
      %p76 = por %p74, %p75
      %s78 = sadd.s32 %s77, 1
      %p81 = scmp.eq.s32.totalorder %s17, 1
      %p82 = scmp.ne.s32.totalorder %s77, %s79
      %p83 = scmp.eq.s32.totalorder %s17, 0
      %p84 = por %p82, %p83
      %p85 = scmp.ne.s32.totalorder %s77, %s79
      %p86 = scmp.eq.s32.totalorder %s22, 1
      %p87 = por %p85, %p86
      %p88 = scmp.ne.s32.totalorder %s79, %s80
      %p89 = scmp.eq.s32.totalorder %s22, 0
      %p90 = por %p88, %p89
      %p91 = scmp.ne.s32.totalorder %s79, %s80
      %p92 = scmp.eq.s32.totalorder %s23, 1
      %p93 = por %p91, %p92
      %p95 = scmp.ne.s32.totalorder %s80, %s94
      %p96 = scmp.eq.s32.totalorder %s23, 0
      %p97 = por %p95, %p96
      %s99 = sadd.s32 %s98, 1
      %p102 = scmp.eq.s32.totalorder %s17, 1
      %p103 = scmp.ne.s32.totalorder %s98, %s100
      %p104 = scmp.eq.s32.totalorder %s17, 0
      %p105 = por %p103, %p104
      %p106 = scmp.ne.s32.totalorder %s98, %s100
      %p107 = scmp.eq.s32.totalorder %s22, 1
      %p108 = por %p106, %p107
      %p109 = scmp.ne.s32.totalorder %s100, %s101
      %p110 = scmp.eq.s32.totalorder %s22, 0
      %p111 = por %p109, %p110
      %p112 = scmp.ne.s32.totalorder %s100, %s101
      %p113 = scmp.eq.s32.totalorder %s23, 1
      %p114 = por %p112, %p113
      %p116 = scmp.ne.s32.totalorder %s101, %s115
      %p117 = scmp.eq.s32.totalorder %s23, 0
      %p118 = por %p116, %p117
      %s120 = sadd.s32 %s119, 1
      %p123 = scmp.eq.s32.totalorder %s17, 1
      %p124 = scmp.ne.s32.totalorder %s119, %s121
      %p125 = scmp.eq.s32.totalorder %s17, 0
      %p126 = por %p124, %p125
      %p127 = scmp.ne.s32.totalorder %s119, %s121
      %p128 = scmp.eq.s32.totalorder %s22, 1
      %p129 = por %p127, %p128
      %p130 = scmp.ne.s32.totalorder %s121, %s122
      %p131 = scmp.eq.s32.totalorder %s22, 0
      %p132 = por %p130, %p131
      %p133 = scmp.ne.s32.totalorder %s121, %s122
      %p134 = scmp.eq.s32.totalorder %s23, 1
      %p135 = por %p133, %p134
      %p137 = scmp.ne.s32.totalorder %s122, %s136
      %p138 = scmp.eq.s32.totalorder %s23, 0
      %p139 = por %p137, %p138
      %s141 = sadd.s32 %s140, 1
      %p144 = scmp.eq.s32.totalorder %s17, 1
      %p145 = scmp.ne.s32.totalorder %s140, %s142
      %p146 = scmp.eq.s32.totalorder %s17, 0
      %p147 = por %p145, %p146
      %p148 = scmp.ne.s32.totalorder %s140, %s142
      %p149 = scmp.eq.s32.totalorder %s22, 1
      %p150 = por %p148, %p149
      %p151 = scmp.ne.s32.totalorder %s142, %s143
      %p152 = scmp.eq.s32.totalorder %s22, 0
      %p153 = por %p151, %p152
      %p154 = scmp.ne.s32.totalorder %s142, %s143
      %p155 = scmp.eq.s32.totalorder %s23, 1
      %p156 = por %p154, %p155
      %p158 = scmp.ne.s32.totalorder %s143, %s157
      %p159 = scmp.eq.s32.totalorder %s23, 0
      %p160 = por %p158, %p159
      %s162 = sadd.s32 %s161, 1
      %p165 = scmp.eq.s32.totalorder %s17, 1
      %p166 = scmp.ne.s32.totalorder %s161, %s163
      %p167 = scmp.eq.s32.totalorder %s17, 0
      %p168 = por %p166, %p167
      %p169 = scmp.ne.s32.totalorder %s161, %s163
      %p170 = scmp.eq.s32.totalorder %s22, 1
      %p171 = por %p169, %p170
      %p172 = scmp.ne.s32.totalorder %s163, %s164
      %p173 = scmp.eq.s32.totalorder %s22, 0
      %p174 = por %p172, %p173
      %p175 = scmp.ne.s32.totalorder %s163, %s164
      %p176 = scmp.eq.s32.totalorder %s23, 1
      %p177 = por %p175, %p176
      %p179 = scmp.ne.s32.totalorder %s164, %s178
      %p180 = scmp.eq.s32.totalorder %s23, 0
      %p181 = por %p179, %p180
      %s183 = sadd.s32 %s182, 1
      %p186 = scmp.eq.s32.totalorder %s17, 1
      %p187 = scmp.ne.s32.totalorder %s182, %s184
      %p188 = scmp.eq.s32.totalorder %s17, 0
      %p189 = por %p187, %p188
      %p190 = scmp.ne.s32.totalorder %s182, %s184
      %p191 = scmp.eq.s32.totalorder %s22, 1
      %p192 = por %p190, %p191
      %p193 = scmp.ne.s32.totalorder %s184, %s185
      %p194 = scmp.eq.s32.totalorder %s22, 0
      %p195 = por %p193, %p194
      %p196 = scmp.ne.s32.totalorder %s184, %s185
      %p197 = scmp.eq.s32.totalorder %s23, 1
      %p198 = por %p196, %p197
      %p200 = scmp.ne.s32.totalorder %s185, %s199
      %p201 = scmp.eq.s32.totalorder %s23, 0
      %p202 = por %p200, %p201
      %s204 = sadd.s32 %s203, 1
      %p207 = scmp.eq.s32.totalorder %s17, 1
      %p208 = scmp.ne.s32.totalorder %s203, %s205
      %p209 = scmp.eq.s32.totalorder %s17, 0
      %p210 = por %p208, %p209
      %p211 = scmp.ne.s32.totalorder %s203, %s205
      %p212 = scmp.eq.s32.totalorder %s22, 1
      %p213 = por %p211, %p212
      %p214 = scmp.ne.s32.totalorder %s205, %s206
      %p215 = scmp.eq.s32.totalorder %s22, 0
      %p216 = por %p214, %p215
      %p217 = scmp.ne.s32.totalorder %s205, %s206
      %p218 = scmp.eq.s32.totalorder %s23, 1
      %p219 = por %p217, %p218
      %p221 = scmp.ne.s32.totalorder %s206, %s220
      %p222 = scmp.eq.s32.totalorder %s23, 0
      %p223 = por %p221, %p222
      %s225 = sadd.s32 %s224, 1
      %p228 = scmp.eq.s32.totalorder %s17, 1
      %p229 = scmp.ne.s32.totalorder %s224, %s226
      %p230 = scmp.eq.s32.totalorder %s17, 0
      %p231 = por %p229, %p230
      %p232 = scmp.ne.s32.totalorder %s224, %s226
      %p233 = scmp.eq.s32.totalorder %s22, 1
      %p234 = por %p232, %p233
      %p235 = scmp.ne.s32.totalorder %s226, %s227
      %p236 = scmp.eq.s32.totalorder %s22, 0
      %p237 = por %p235, %p236
      %p238 = scmp.ne.s32.totalorder %s226, %s227
      %p239 = scmp.eq.s32.totalorder %s23, 1
      %p240 = por %p238, %p239
      %p242 = scmp.ne.s32.totalorder %s227, %s241
      %p243 = scmp.eq.s32.totalorder %s23, 0
      %p244 = por %p242, %p243
      %s245 = ssub.s32 %s17, %s24
      %p246 = scmp.eq.s32.totalorder %s245, 0
      %s248 = sadd.s32 %s247, 1
      %s249 = scalar_select %p246, %s247, %s248
      %p252 = pneg %p246
      %p253 = scmp.eq.s32.totalorder %s17, 1
      %p254 = por %p252, %p253
      %p255 = scmp.ne.s32.totalorder %s247, %s250
      %p256 = scmp.eq.s32.totalorder %s17, 0
      %p257 = por %p255, %p256
      %p258 = scmp.ne.s32.totalorder %s247, %s250
      %p259 = scmp.eq.s32.totalorder %s22, 1
      %p260 = por %p258, %p259
      %p261 = scmp.ne.s32.totalorder %s250, %s251
      %p262 = scmp.eq.s32.totalorder %s22, 0
      %p263 = por %p261, %p262
      %p264 = scmp.ne.s32.totalorder %s250, %s251
      %p265 = scmp.eq.s32.totalorder %s23, 1
      %p266 = por %p264, %p265
      %p268 = scmp.ne.s32.totalorder %s251, %s267
      %p269 = scmp.eq.s32.totalorder %s23, 0
      %p270 = por %p268, %p269
      %p271 = scmp.le.s32.totalorder 1, %s17
      %p272 = scmp.lt.s32.totalorder %s17, 3
      %p273 = pnand %p271, %p272
      %p274 = pneg %p273
      // Predicated region
      $region9: #{deepfm_forward.1} parent=5 // pred_check
        _
      $region10: #{deepfm_forward.1} parent=5 // pred_check_branch
        %276 = sbr.rel (%p273) target = $region12
      $region11: #{deepfm_forward.1} parent=5 // pred_region
        %s277 = ssub.s32 %s17, 1
        // Predicated region
        $region13: #{deepfm_forward.1} parent=11 // pred_check
          %p278 = pneg %p90
        $region14: #{deepfm_forward.1} parent=11 // pred_check_branch
          %280 = sbr.rel (%p278) target = $region16
        $region15: #{deepfm_forward.1} parent=11 // pred_region
          _
        $region16: #{deepfm_forward.1} parent=11 // pred_fallthru
          _
        // Predicated region
        $region17: #{deepfm_forward.1} parent=11 // pred_check
          %p281 = pneg %p111
        $region18: #{deepfm_forward.1} parent=11 // pred_check_branch
          %283 = sbr.rel (%p281) target = $region20
        $region19: #{deepfm_forward.1} parent=11 // pred_region
          _
        $region20: #{deepfm_forward.1} parent=11 // pred_fallthru
          _
        // Predicated region
        $region21: #{deepfm_forward.1} parent=11 // pred_check
          %p284 = pneg %p132
        $region22: #{deepfm_forward.1} parent=11 // pred_check_branch
          %286 = sbr.rel (%p284) target = $region24
        $region23: #{deepfm_forward.1} parent=11 // pred_region
          _
        $region24: #{deepfm_forward.1} parent=11 // pred_fallthru
          _
        // Predicated region
        $region25: #{deepfm_forward.1} parent=11 // pred_check
          %p287 = pneg %p153
        $region26: #{deepfm_forward.1} parent=11 // pred_check_branch
          %289 = sbr.rel (%p287) target = $region28
        $region27: #{deepfm_forward.1} parent=11 // pred_region
          _
        $region28: #{deepfm_forward.1} parent=11 // pred_fallthru
          _
        // Predicated region
        $region29: #{deepfm_forward.1} parent=11 // pred_check
          %p290 = pneg %p174
        $region30: #{deepfm_forward.1} parent=11 // pred_check_branch
          %292 = sbr.rel (%p290) target = $region32
        $region31: #{deepfm_forward.1} parent=11 // pred_region
          _
        $region32: #{deepfm_forward.1} parent=11 // pred_fallthru
          _
        // Predicated region
        $region33: #{deepfm_forward.1} parent=11 // pred_check
          %p293 = pneg %p195
        $region34: #{deepfm_forward.1} parent=11 // pred_check_branch
          %295 = sbr.rel (%p293) target = $region36
        $region35: #{deepfm_forward.1} parent=11 // pred_region
          _
        $region36: #{deepfm_forward.1} parent=11 // pred_fallthru
          _
        // Predicated region
        $region37: #{deepfm_forward.1} parent=11 // pred_check
          %p296 = pneg %p216
        $region38: #{deepfm_forward.1} parent=11 // pred_check_branch
          %298 = sbr.rel (%p296) target = $region40
        $region39: #{deepfm_forward.1} parent=11 // pred_region
          _
        $region40: #{deepfm_forward.1} parent=11 // pred_fallthru
          _
        // Predicated region
        $region41: #{deepfm_forward.1} parent=11 // pred_check
          %p299 = pneg %p237
        $region42: #{deepfm_forward.1} parent=11 // pred_check_branch
          %301 = sbr.rel (%p299) target = $region44
        $region43: #{deepfm_forward.1} parent=11 // pred_region
          %s303 = ssub.s32 16, 16
          %304 = vsyncadd [#allocation3], %s303
          %s306 = sshll.u32 %s9, 4
          %s307 = int_to_ptr.vmem [resolvable:$true] %s306
          %309 = dma.vmem_to_smem %s307, 16, [#allocation2], [#allocation3]
        $region44: #{deepfm_forward.1} parent=11 // pred_fallthru
          _
      $region12: #{deepfm_forward.1} parent=5 // pred_fallthru
        _
      %p310 = scmp.lt.s32.totalorder %s17, 2
      // Predicated region
      $region45: #{deepfm_forward.1} parent=5 // pred_check
        %p311 = pneg %p310
      $region46: #{deepfm_forward.1} parent=5 // pred_check_branch
        %313 = sbr.rel (%p311) target = $region48
      $region47: #{deepfm_forward.1} parent=5 // pred_region
        // Predicated region
        $region49: #{deepfm_forward.1} parent=47 // pred_check
          %p314 = pneg %p37
        $region50: #{deepfm_forward.1} parent=47 // pred_check_branch
          %316 = sbr.rel (%p314) target = $region52
        $region51: #{deepfm_forward.1} parent=47 // pred_region
          %s317 = smul.u32 16, %s17
          %p318 = scmp.lt.s32.totalorder %s317, 31
          %s319 = scalar_select %p318, %s317, 31
          %s320 = smul.addr %s319, 4
          %s321 = scalar_lea.vmem %s0, %s320
          %s322 = smul.u32 16, %s17
        $region52: #{deepfm_forward.1} parent=47 // pred_fallthru
          _
        // Predicated region
        $region53: #{deepfm_forward.1} parent=47 // pred_check
          %p323 = pneg %p63
        $region54: #{deepfm_forward.1} parent=47 // pred_check_branch
          %325 = sbr.rel (%p323) target = $region56
        $region55: #{deepfm_forward.1} parent=47 // pred_region
          %s326 = smul.u32 16, %s17
          %p327 = scmp.lt.s32.totalorder %s326, 31
          %s328 = scalar_select %p327, %s326, 31
          %s329 = smul.addr %s328, 8
          %s330 = scalar_lea.vmem %s1, %s329
          %s331 = smul.u32 16, %s17
        $region56: #{deepfm_forward.1} parent=47 // pred_fallthru
          _
      $region48: #{deepfm_forward.1} parent=5 // pred_fallthru
        _
      %p332 = scmp.le.s32.totalorder 1, %s17
      %p333 = scmp.lt.s32.totalorder %s17, 3
      %p334 = pnand %p332, %p333
      %p335 = pneg %p334
      // Predicated region
      $region57: #{deepfm_forward.1} parent=5 // pred_check
        _
      $region58: #{deepfm_forward.1} parent=5 // pred_check_branch
        %337 = sbr.rel (%p334) target = $region60
      $region59: #{deepfm_forward.1} parent=5 // pred_region
        %s338 = ssub.s32 %s17, 1
        // Predicated region
        $region61: #{deepfm_forward.1} parent=59 // pred_check
          %p339 = pneg %p237
        $region62: #{deepfm_forward.1} parent=59 // pred_check_branch
          %341 = sbr.rel (%p339) target = $region64
        $region63: #{deepfm_forward.1} parent=59 // pred_region
          %342 = dma.done [#allocation3], 16
        $region64: #{deepfm_forward.1} parent=59 // pred_fallthru
          _
        %343 = sfence
        %s344 = smul.u32 16, %s22
        %p345 = scmp.lt.s32.totalorder %s344, 31
        %s346 = scalar_select %p345, %s344, 31
        %s347 = smul.addr %s346, 4
        %s348 = scalar_lea.vmem %s0, %s347
        %p349 = pneg %p43
        %p350 = pneg %p40
        %s351 = smul.u32 16, %s22
        %p352 = scmp.lt.s32.totalorder %s351, 31
        %s353 = scalar_select %p352, %s351, 31
        %s354 = smul.addr %s353, 8
        %s355 = scalar_lea.vmem %s1, %s354
        %p356 = pneg %p69
        %p357 = pneg %p66
        %p358 = pneg %p90
        %p359 = pneg %p87
        %p360 = pneg %p111
        %p361 = pneg %p108
        %p362 = pneg %p132
        %p363 = pneg %p129
        %p364 = pneg %p153
        %p365 = pneg %p150
        %p366 = pneg %p174
        %p367 = pneg %p171
        %p368 = pneg %p195
        %p369 = pneg %p192
        %p370 = pneg %p216
        %p371 = pneg %p213
        %p372 = pneg %p237
        %p373 = pneg %p234
        %p374 = pneg %p263
        %p375 = pneg %p260
        %s376 = smul.u32 16, %s22
        %p377 = scmp.lt.s32.totalorder %s376, 31
        %s378 = scalar_select %p377, %s376, 31
        %s379 = smul.addr %s378, 8
        %s380 = scalar_lea.vmem %s10, %s379
        %s381 = smul.u32 16, %s22
        %p382 = scmp.lt.s32.totalorder %s381, 31
        %s383 = scalar_select %p382, %s381, 31
        %s384 = smul.addr %s383, 4
        %s385 = scalar_lea.vmem %s0, %s384
        %s386 = smul.u32 16, %s22
        %s387 = smul.u32 16, %s22
        %p388 = scmp.lt.s32.totalorder %s387, 31
        %s389 = scalar_select %p388, %s387, 31
        %s390 = smul.addr %s389, 8
        %s391 = scalar_lea.vmem %s1, %s390
        %s392 = smul.u32 16, %s22
        %s393 = smul.u32 16, %s22
        %p394 = scmp.lt.s32.totalorder %s393, 31
        %s395 = scalar_select %p394, %s393, 31
        %s396 = smul.addr %s395, 8
        %s397 = scalar_lea.vmem %s10, %s396
        %s398 = smul.u32 16, %s22
        %v400 = vld [vmem:[%s385] sm:$0xf]
        %v401 = vld [vmem:[%s385 + $0x4] sm:$0xf]
        %v402 = vld [vmem:[%s385 + $0x8] sm:$0xf]
        %v403 = vld [vmem:[%s385 + $0xc] sm:$0xf]
        %v404 = vld [vmem:[%s385 + $0x10] sm:$0xf]
        %v405 = vld [vmem:[%s385 + $0x14] sm:$0xf]
        %v406 = vld [vmem:[%s385 + $0x18] sm:$0xf]
        %v407 = vld [vmem:[%s385 + $0x1c] sm:$0xf]
        %v408 = vld [vmem:[%s385 + $0x20] sm:$0xf]
        %v409 = vld [vmem:[%s385 + $0x24] sm:$0xf]
        %v410 = vld [vmem:[%s385 + $0x28] sm:$0xf]
        %v411 = vld [vmem:[%s385 + $0x2c] sm:$0xf]
        %v412 = vld [vmem:[%s385 + $0x30] sm:$0xf]
        %v413 = vld [vmem:[%s385 + $0x34] sm:$0xf]
        %v414 = vld [vmem:[%s385 + $0x38] sm:$0xf]
        %v415 = vld [vmem:[%s385 + $0x3c] sm:$0xf]
        %v416 = vunpack.c.l.bf16 %v400
        %v417 = vunpack.c.l.bf16 %v401
        %v418 = vunpack.c.l.bf16 %v402
        %v419 = vunpack.c.l.bf16 %v403
        %v420 = vunpack.c.l.bf16 %v404
        %v421 = vunpack.c.l.bf16 %v405
        %v422 = vunpack.c.l.bf16 %v406
        %v423 = vunpack.c.l.bf16 %v407
        %v424 = vunpack.c.l.bf16 %v408
        %v425 = vunpack.c.l.bf16 %v409
        %v426 = vunpack.c.l.bf16 %v410
        %v427 = vunpack.c.l.bf16 %v411
        %v428 = vunpack.c.l.bf16 %v412
        %v429 = vunpack.c.l.bf16 %v413
        %v430 = vunpack.c.l.bf16 %v414
        %v431 = vunpack.c.l.bf16 %v415
        %v432 = vld [vmem:[%s2] sm:$0xff]
        %v433 = vld [vmem:[%s2 + $0x8] sm:$0xff]
        %v434 = vld [vmem:[%s2 + $0x10] sm:$0xff]
        %v435 = vld [vmem:[%s2 + $0x18] sm:$0xff]
        %v452 = vunpack.c.l.b16 %v400
        %v453 = vunpack.c.l.b16 %v401
        %v454 = vunpack.c.l.b16 %v402
        %v455 = vunpack.c.l.b16 %v403
        %v456 = vunpack.c.l.b16 %v404
        %v457 = vunpack.c.l.b16 %v405
        %v458 = vunpack.c.l.b16 %v406
        %v459 = vunpack.c.l.b16 %v407
        %v460 = vunpack.c.l.b16 %v408
        %v461 = vunpack.c.l.b16 %v409
        %v462 = vunpack.c.l.b16 %v410
        %v463 = vunpack.c.l.b16 %v411
        %v464 = vunpack.c.l.b16 %v412
        %v465 = vunpack.c.l.b16 %v413
        %v466 = vunpack.c.l.b16 %v414
        %v467 = vunpack.c.l.b16 %v415
        %v468 = vpack.c.b16 %v453, %v452
        %v469 = vpack.c.b16 %v455, %v454
        %v470 = vpack.c.b16 %v457, %v456
        %v471 = vpack.c.b16 %v459, %v458
        %v472 = vpack.c.b16 %v461, %v460
        %v473 = vpack.c.b16 %v463, %v462
        %v474 = vpack.c.b16 %v465, %v464
        %v475 = vpack.c.b16 %v467, %v466
        %v480 = vunpack.c.l.b16 %v432
        %v481 = vunpack.c.h.b16 %v432
        %v482 = vunpack.c.l.b16 %v433
        %v483 = vunpack.c.h.b16 %v433
        %v484 = vunpack.c.l.b16 %v434
        %v485 = vunpack.c.h.b16 %v434
        %v486 = vunpack.c.l.b16 %v435
        %v487 = vunpack.c.h.b16 %v435
        %v488 = vpack.c.b16 %v482, %v480
        %v489 = vpack.c.b16 %v483, %v481
        %v490 = vpack.c.b16 %v486, %v484
        %v491 = vpack.c.b16 %v487, %v485
        %vm496 = vcmask 261120
        %v498 = vsel %vm496, %v468, 0
        %v501 = vsel %vm496, %v469, 0
        %v504 = vsel %vm496, %v470, 0
        %v507 = vsel %vm496, %v471, 0
        %v510 = vsel %vm496, %v472, 0
        %v513 = vsel %vm496, %v473, 0
        %v516 = vsel %vm496, %v474, 0
        %v519 = vsel %vm496, %v475, 0
        %521 = vmatprep.subr.bf16.mxu0 0
        %522 = vmatpush1.bf16.msra.mxu0 0
        %523 = vmatprep.subr.bf16.mxu0 0
        %524 = vmatpush1.bf16.msra.mxu0 0
        %525 = vmatprep.subr.bf16.mxu0 0
        %526 = vmatpush1.bf16.msra.mxu0 0
        %527 = vmatprep.subr.bf16.mxu0 0
        %528 = vmatpush1.bf16.msra.mxu0 0
        %529 = vmatprep.subr.bf16.mxu0 0
        %530 = vmatpush1.bf16.msra.mxu0 0
        %531 = vmatprep.subr.bf16.mxu0 0
        %532 = vmatpush1.bf16.msra.mxu0 0
        %533 = vmatprep.subr.bf16.mxu0 %v491
        %534 = vmatpush1.bf16.msra.mxu0 %v490
        %535 = vmatprep.subr.bf16.mxu0 %v489
        %536 = vmatpush1.bf16.msra.mxu0 %v488
        %537 = vmatprep.subr.bf16.mxu0 0
        %538 = vmatpush2.bf16.msra.mxu0 0
        %539 = vmatprep.subr.bf16.mxu0 0
        %540 = vmatpush2.bf16.msra.mxu0 0
        %541 = vmatprep.subr.bf16.mxu0 0
        %542 = vmatpush2.bf16.msra.mxu0 0
        %543 = vmatprep.subr.bf16.mxu0 0
        %544 = vmatpush2.bf16.msra.mxu0 0
        %545 = vmatprep.subr.bf16.mxu0 0
        %546 = vmatpush2.bf16.msra.mxu0 0
        %547 = vmatprep.subr.bf16.mxu0 0
        %548 = vmatpush2.bf16.msra.mxu0 0
        %549 = vmatprep.subr.bf16.mxu0 0
        %550 = vmatpush2.bf16.msra.mxu0 0
        %551 = vmatprep.subr.bf16.mxu0 0
        %552 = vmatpush2.bf16.msra.mxu0 0
        %553 = vmatprep.mubr.bf16.mxu0 0
        %554 = vmatmul.mubr.bf16.gmra.mxu0 %v498
        %v555 = vpop.f32.mrf.mxu0
        %v556 = vadd.f32 0.0, %v555
        %v557 = vpop.f32.mrf.mxu0
        %v558 = vadd.f32 0.0, %v557
        %v559 = vpop.f32.mrf.mxu0
        %v560 = vadd.f32 0.0, %v559
        %v561 = vpop.f32.mrf.mxu0
        %v562 = vadd.f32 0.0, %v561
        %563 = vmatprep.mubr.bf16.mxu0 0
        %564 = vmatmul.mubr.bf16.gmra.mxu0 %v501
        %v565 = vpop.f32.mrf.mxu0
        %v566 = vadd.f32 0.0, %v565
        %v567 = vpop.f32.mrf.mxu0
        %v568 = vadd.f32 0.0, %v567
        %v569 = vpop.f32.mrf.mxu0
        %v570 = vadd.f32 0.0, %v569
        %v571 = vpop.f32.mrf.mxu0
        %v572 = vadd.f32 0.0, %v571
        %573 = vmatprep.mubr.bf16.mxu0 0
        %574 = vmatmul.mubr.bf16.gmra.mxu0 %v504
        %v575 = vpop.f32.mrf.mxu0
        %v576 = vadd.f32 0.0, %v575
        %v577 = vpop.f32.mrf.mxu0
        %v578 = vadd.f32 0.0, %v577
        %v579 = vpop.f32.mrf.mxu0
        %v580 = vadd.f32 0.0, %v579
        %v581 = vpop.f32.mrf.mxu0
        %v582 = vadd.f32 0.0, %v581
        %583 = vmatprep.mubr.bf16.mxu0 0
        %584 = vmatmul.mubr.bf16.gmra.mxu0 %v507
        %v585 = vpop.f32.mrf.mxu0
        %v586 = vadd.f32 0.0, %v585
        %v587 = vpop.f32.mrf.mxu0
        %v588 = vadd.f32 0.0, %v587
        %v589 = vpop.f32.mrf.mxu0
        %v590 = vadd.f32 0.0, %v589
        %v591 = vpop.f32.mrf.mxu0
        %v592 = vadd.f32 0.0, %v591
        %593 = vmatprep.mubr.bf16.mxu0 0
        %594 = vmatmul.mubr.bf16.gmra.mxu0 %v510
        %v595 = vpop.f32.mrf.mxu0
        %v596 = vadd.f32 0.0, %v595
        %v597 = vpop.f32.mrf.mxu0
        %v598 = vadd.f32 0.0, %v597
        %v599 = vpop.f32.mrf.mxu0
        %v600 = vadd.f32 0.0, %v599
        %v601 = vpop.f32.mrf.mxu0
        %v602 = vadd.f32 0.0, %v601
        %603 = vmatprep.mubr.bf16.mxu0 0
        %604 = vmatmul.mubr.bf16.gmra.mxu0 %v513
        %v605 = vpop.f32.mrf.mxu0
        %v606 = vadd.f32 0.0, %v605
        %v607 = vpop.f32.mrf.mxu0
        %v608 = vadd.f32 0.0, %v607
        %v609 = vpop.f32.mrf.mxu0
        %v610 = vadd.f32 0.0, %v609
        %v611 = vpop.f32.mrf.mxu0
        %v612 = vadd.f32 0.0, %v611
        %613 = vmatprep.mubr.bf16.mxu0 0
        %614 = vmatmul.mubr.bf16.gmra.mxu0 %v516
        %v615 = vpop.f32.mrf.mxu0
        %v616 = vadd.f32 0.0, %v615
        %v617 = vpop.f32.mrf.mxu0
        %v618 = vadd.f32 0.0, %v617
        %v619 = vpop.f32.mrf.mxu0
        %v620 = vadd.f32 0.0, %v619
        %v621 = vpop.f32.mrf.mxu0
        %v622 = vadd.f32 0.0, %v621
        %623 = vmatprep.mubr.bf16.mxu0 0
        %624 = vmatmul.mubr.bf16.gmra.mxu0 %v519
        %v625 = vpop.f32.mrf.mxu0
        %v626 = vadd.f32 0.0, %v625
        %v627 = vpop.f32.mrf.mxu0
        %v628 = vadd.f32 0.0, %v627
        %v629 = vpop.f32.mrf.mxu0
        %v630 = vadd.f32 0.0, %v629
        %v631 = vpop.f32.mrf.mxu0
        %v632 = vadd.f32 0.0, %v631
        %633 = vdwg.mxu0
        %v634 = vmul.f32 %v416, %v416
        %v635 = vmul.f32 %v417, %v417
        %v636 = vmul.f32 %v418, %v418
        %v637 = vmul.f32 %v419, %v419
        %v638 = vmul.f32 %v420, %v420
        %v639 = vmul.f32 %v421, %v421
        %v640 = vmul.f32 %v422, %v422
        %v641 = vmul.f32 %v423, %v423
        %v642 = vmul.f32 %v424, %v424
        %v643 = vmul.f32 %v425, %v425
        %v644 = vmul.f32 %v426, %v426
        %v645 = vmul.f32 %v427, %v427
        %v646 = vmul.f32 %v428, %v428
        %v647 = vmul.f32 %v429, %v429
        %v648 = vmul.f32 %v430, %v430
        %v649 = vmul.f32 %v431, %v431
        %v650 = vsel %vm496, %v634, 0.0
        %651 = vadd.xlane.f32.xlu0 %v650
        %v652 = vpop.xlane.xlu0 %651
        %v653 = vsel %vm496, %v635, 0.0
        %654 = vadd.xlane.f32.xlu0 %v653
        %v655 = vpop.xlane.xlu0 %654
        %v656 = vsel %vm496, %v636, 0.0
        %657 = vadd.xlane.f32.xlu0 %v656
        %v658 = vpop.xlane.xlu0 %657
        %v659 = vsel %vm496, %v637, 0.0
        %660 = vadd.xlane.f32.xlu0 %v659
        %v661 = vpop.xlane.xlu0 %660
        %v662 = vsel %vm496, %v638, 0.0
        %663 = vadd.xlane.f32.xlu0 %v662
        %v664 = vpop.xlane.xlu0 %663
        %v665 = vsel %vm496, %v639, 0.0
        %666 = vadd.xlane.f32.xlu0 %v665
        %v667 = vpop.xlane.xlu0 %666
        %v668 = vsel %vm496, %v640, 0.0
        %669 = vadd.xlane.f32.xlu0 %v668
        %v670 = vpop.xlane.xlu0 %669
        %v671 = vsel %vm496, %v641, 0.0
        %672 = vadd.xlane.f32.xlu0 %v671
        %v673 = vpop.xlane.xlu0 %672
        %v674 = vsel %vm496, %v642, 0.0
        %675 = vadd.xlane.f32.xlu0 %v674
        %v676 = vpop.xlane.xlu0 %675
        %v677 = vsel %vm496, %v643, 0.0
        %678 = vadd.xlane.f32.xlu0 %v677
        %v679 = vpop.xlane.xlu0 %678
        %v680 = vsel %vm496, %v644, 0.0
        %681 = vadd.xlane.f32.xlu0 %v680
        %v682 = vpop.xlane.xlu0 %681
        %v683 = vsel %vm496, %v645, 0.0
        %684 = vadd.xlane.f32.xlu0 %v683
        %v685 = vpop.xlane.xlu0 %684
        %v686 = vsel %vm496, %v646, 0.0
        %687 = vadd.xlane.f32.xlu0 %v686
        %v688 = vpop.xlane.xlu0 %687
        %v689 = vsel %vm496, %v647, 0.0
        %690 = vadd.xlane.f32.xlu0 %v689
        %v691 = vpop.xlane.xlu0 %690
        %v692 = vsel %vm496, %v648, 0.0
        %693 = vadd.xlane.f32.xlu0 %v692
        %v694 = vpop.xlane.xlu0 %693
        %v695 = vsel %vm496, %v649, 0.0
        %696 = vadd.xlane.f32.xlu0 %v695
        %v697 = vpop.xlane.xlu0 %696
        %v698 = vmul.f32 %v556, %v556
        %v699 = vmul.f32 %v560, %v560
        %v700 = vmul.f32 %v566, %v566
        %v701 = vmul.f32 %v570, %v570
        %v702 = vmul.f32 %v576, %v576
        %v703 = vmul.f32 %v580, %v580
        %v704 = vmul.f32 %v586, %v586
        %v705 = vmul.f32 %v590, %v590
        %v706 = vmul.f32 %v596, %v596
        %v707 = vmul.f32 %v600, %v600
        %v708 = vmul.f32 %v606, %v606
        %v709 = vmul.f32 %v610, %v610
        %v710 = vmul.f32 %v616, %v616
        %v711 = vmul.f32 %v620, %v620
        %v712 = vmul.f32 %v626, %v626
        %v713 = vmul.f32 %v630, %v630
        %714 = vadd.xlane.f32.xlu0 %v698
        %v715 = vpop.xlane.xlu0 %714
        %716 = vadd.xlane.f32.xlu0 %v699
        %v717 = vpop.xlane.xlu0 %716
        %718 = vadd.xlane.f32.xlu0 %v700
        %v719 = vpop.xlane.xlu0 %718
        %720 = vadd.xlane.f32.xlu0 %v701
        %v721 = vpop.xlane.xlu0 %720
        %722 = vadd.xlane.f32.xlu0 %v702
        %v723 = vpop.xlane.xlu0 %722
        %724 = vadd.xlane.f32.xlu0 %v703
        %v725 = vpop.xlane.xlu0 %724
        %726 = vadd.xlane.f32.xlu0 %v704
        %v727 = vpop.xlane.xlu0 %726
        %728 = vadd.xlane.f32.xlu0 %v705
        %v729 = vpop.xlane.xlu0 %728
        %730 = vadd.xlane.f32.xlu0 %v706
        %v731 = vpop.xlane.xlu0 %730
        %732 = vadd.xlane.f32.xlu0 %v707
        %v733 = vpop.xlane.xlu0 %732
        %734 = vadd.xlane.f32.xlu0 %v708
        %v735 = vpop.xlane.xlu0 %734
        %736 = vadd.xlane.f32.xlu0 %v709
        %v737 = vpop.xlane.xlu0 %736
        %738 = vadd.xlane.f32.xlu0 %v710
        %v739 = vpop.xlane.xlu0 %738
        %740 = vadd.xlane.f32.xlu0 %v711
        %v741 = vpop.xlane.xlu0 %740
        %742 = vadd.xlane.f32.xlu0 %v712
        %v743 = vpop.xlane.xlu0 %742
        %744 = vadd.xlane.f32.xlu0 %v713
        %v745 = vpop.xlane.xlu0 %744
        %v746 = vsub.f32 %v715, %v652
        %v747 = vsub.f32 %v717, %v655
        %v748 = vsub.f32 %v719, %v658
        %v749 = vsub.f32 %v721, %v661
        %v750 = vsub.f32 %v723, %v664
        %v751 = vsub.f32 %v725, %v667
        %v752 = vsub.f32 %v727, %v670
        %v753 = vsub.f32 %v729, %v673
        %v754 = vsub.f32 %v731, %v676
        %v755 = vsub.f32 %v733, %v679
        %v756 = vsub.f32 %v735, %v682
        %v757 = vsub.f32 %v737, %v685
        %v758 = vsub.f32 %v739, %v688
        %v759 = vsub.f32 %v741, %v691
        %v760 = vsub.f32 %v743, %v694
        %v761 = vsub.f32 %v745, %v697
        %v762 = vmul.f32 %v746, 0.5
        %v763 = vmul.f32 %v747, 0.5
        %v764 = vmul.f32 %v748, 0.5
        %v765 = vmul.f32 %v749, 0.5
        %v766 = vmul.f32 %v750, 0.5
        %v767 = vmul.f32 %v751, 0.5
        %v768 = vmul.f32 %v752, 0.5
        %v769 = vmul.f32 %v753, 0.5
        %v770 = vmul.f32 %v754, 0.5
        %v771 = vmul.f32 %v755, 0.5
        %v772 = vmul.f32 %v756, 0.5
        %v773 = vmul.f32 %v757, 0.5
        %v774 = vmul.f32 %v758, 0.5
        %v775 = vmul.f32 %v759, 0.5
        %v776 = vmul.f32 %v760, 0.5
        %v777 = vmul.f32 %v761, 0.5
        %s778 = sld [smem:[#allocation2]]
        %s779 = sld [smem:[#allocation2 + $0x1]]
        %s780 = sld [smem:[#allocation2 + $0x2]]
        %v781 = vld [vmem:[%s391] sm:$0xff]
        %v782 = vld [vmem:[%s391 + $0x8] sm:$0xff]
        %v783 = vld [vmem:[%s391 + $0x10] sm:$0xff]
        %v784 = vld [vmem:[%s391 + $0x18] sm:$0xff]
        %v785 = vld [vmem:[%s391 + $0x20] sm:$0xff]
        %v786 = vld [vmem:[%s391 + $0x28] sm:$0xff]
        %v787 = vld [vmem:[%s391 + $0x30] sm:$0xff]
        %v788 = vld [vmem:[%s391 + $0x38] sm:$0xff]
        %v789 = vld [vmem:[%s391 + $0x40] sm:$0xff]
        %v790 = vld [vmem:[%s391 + $0x48] sm:$0xff]
        %v791 = vld [vmem:[%s391 + $0x50] sm:$0xff]
        %v792 = vld [vmem:[%s391 + $0x58] sm:$0xff]
        %v793 = vld [vmem:[%s391 + $0x60] sm:$0xff]
        %v794 = vld [vmem:[%s391 + $0x68] sm:$0xff]
        %v795 = vld [vmem:[%s391 + $0x70] sm:$0xff]
        %v796 = vld [vmem:[%s391 + $0x78] sm:$0xff]
        %v797 = vadd.f32 %v781, %v762
        %v798 = vadd.f32 %v782, %v763
        %v799 = vadd.f32 %v783, %v764
        %v800 = vadd.f32 %v784, %v765
        %v801 = vadd.f32 %v785, %v766
        %v802 = vadd.f32 %v786, %v767
        %v803 = vadd.f32 %v787, %v768
        %v804 = vadd.f32 %v788, %v769
        %v805 = vadd.f32 %v789, %v770
        %v806 = vadd.f32 %v790, %v771
        %v807 = vadd.f32 %v791, %v772
        %v808 = vadd.f32 %v792, %v773
        %v809 = vadd.f32 %v793, %v774
        %v810 = vadd.f32 %v794, %v775
        %v811 = vadd.f32 %v795, %v776
        %v812 = vadd.f32 %v796, %v777
        %v813 = vstv %s778
        %v814 = vmul.f32 %v797, %v813
        %v815 = vmul.f32 %v798, %v813
        %v816 = vmul.f32 %v799, %v813
        %v817 = vmul.f32 %v800, %v813
        %v818 = vmul.f32 %v801, %v813
        %v819 = vmul.f32 %v802, %v813
        %v820 = vmul.f32 %v803, %v813
        %v821 = vmul.f32 %v804, %v813
        %v822 = vmul.f32 %v805, %v813
        %v823 = vmul.f32 %v806, %v813
        %v824 = vmul.f32 %v807, %v813
        %v825 = vmul.f32 %v808, %v813
        %v826 = vmul.f32 %v809, %v813
        %v827 = vmul.f32 %v810, %v813
        %v828 = vmul.f32 %v811, %v813
        %v829 = vmul.f32 %v812, %v813
        %v830 = vstv %s779
        %v831 = vadd.f32 %v814, %v830
        %v832 = vadd.f32 %v815, %v830
        %v833 = vadd.f32 %v816, %v830
        %v834 = vadd.f32 %v817, %v830
        %v835 = vadd.f32 %v818, %v830
        %v836 = vadd.f32 %v819, %v830
        %v837 = vadd.f32 %v820, %v830
        %v838 = vadd.f32 %v821, %v830
        %v839 = vadd.f32 %v822, %v830
        %v840 = vadd.f32 %v823, %v830
        %v841 = vadd.f32 %v824, %v830
        %v842 = vadd.f32 %v825, %v830
        %v843 = vadd.f32 %v826, %v830
        %v844 = vadd.f32 %v827, %v830
        %v845 = vadd.f32 %v828, %v830
        %v846 = vadd.f32 %v829, %v830
        %v847 = vld [vmem:[%s3] sm:$0x1]
        %v849 = vlaneseq
        %v850 = vshrl.u32 %v849, 7
        %v851 = vsub.s32 0, %v850
        %v852 = vrot.slane %v847, %v851
        %v854 = vadd.f32 %v558, %v852
        %v855 = vadd.f32 %v562, %v852
        %v856 = vadd.f32 %v568, %v852
        %v857 = vadd.f32 %v572, %v852
        %v858 = vadd.f32 %v578, %v852
        %v859 = vadd.f32 %v582, %v852
        %v860 = vadd.f32 %v588, %v852
        %v861 = vadd.f32 %v592, %v852
        %v862 = vadd.f32 %v598, %v852
        %v863 = vadd.f32 %v602, %v852
        %v864 = vadd.f32 %v608, %v852
        %v865 = vadd.f32 %v612, %v852
        %v866 = vadd.f32 %v618, %v852
        %v867 = vadd.f32 %v622, %v852
        %v868 = vadd.f32 %v628, %v852
        %v869 = vadd.f32 %v632, %v852
        %v870 = vmax.f32 %v854, 0.0
        %v871 = vmax.f32 %v855, 0.0
        %v872 = vmax.f32 %v856, 0.0
        %v873 = vmax.f32 %v857, 0.0
        %v874 = vmax.f32 %v858, 0.0
        %v875 = vmax.f32 %v859, 0.0
        %v876 = vmax.f32 %v860, 0.0
        %v877 = vmax.f32 %v861, 0.0
        %v878 = vmax.f32 %v862, 0.0
        %v879 = vmax.f32 %v863, 0.0
        %v880 = vmax.f32 %v864, 0.0
        %v881 = vmax.f32 %v865, 0.0
        %v882 = vmax.f32 %v866, 0.0
        %v883 = vmax.f32 %v867, 0.0
        %v884 = vmax.f32 %v868, 0.0
        %v885 = vmax.f32 %v869, 0.0
        %v886 = vpack.c.bf16 %v871, %v870
        %v887 = vpack.c.bf16 %v873, %v872
        %v888 = vpack.c.bf16 %v875, %v874
        %v889 = vpack.c.bf16 %v877, %v876
        %v890 = vpack.c.bf16 %v879, %v878
        %v891 = vpack.c.bf16 %v881, %v880
        %v892 = vpack.c.bf16 %v883, %v882
        %v893 = vpack.c.bf16 %v885, %v884
        %v894 = vld [vmem:[%s4] sm:$0xf]
        %v895 = vld [vmem:[%s4 + $0x4] sm:$0xf]
        %v896 = vld [vmem:[%s4 + $0x8] sm:$0xf]
        %v897 = vld [vmem:[%s4 + $0xc] sm:$0xf]
        %v898 = vld [vmem:[%s4 + $0x10] sm:$0xf]
        %v899 = vld [vmem:[%s4 + $0x14] sm:$0xf]
        %v900 = vld [vmem:[%s4 + $0x18] sm:$0xf]
        %v901 = vld [vmem:[%s4 + $0x1c] sm:$0xf]
        %v902 = vld [vmem:[%s4 + $0x20] sm:$0xf]
        %v903 = vld [vmem:[%s4 + $0x24] sm:$0xf]
        %v904 = vld [vmem:[%s4 + $0x28] sm:$0xf]
        %v905 = vld [vmem:[%s4 + $0x2c] sm:$0xf]
        %v906 = vld [vmem:[%s4 + $0x30] sm:$0xf]
        %v907 = vld [vmem:[%s4 + $0x34] sm:$0xf]
        %v908 = vld [vmem:[%s4 + $0x38] sm:$0xf]
        %v909 = vld [vmem:[%s4 + $0x3c] sm:$0xf]
        %v910 = vld [vmem:[%s5] sm:$0x1]
        %v912 = vlaneseq
        %v913 = vshrl.u32 %v912, 7
        %v914 = vsub.s32 0, %v913
        %v915 = vrot.slane %v910, %v914
        %v933 = vunpack.c.l.b16 %v894
        %v934 = vunpack.c.l.b16 %v895
        %v935 = vunpack.c.l.b16 %v896
        %v936 = vunpack.c.l.b16 %v897
        %v937 = vunpack.c.l.b16 %v898
        %v938 = vunpack.c.l.b16 %v899
        %v939 = vunpack.c.l.b16 %v900
        %v940 = vunpack.c.l.b16 %v901
        %v941 = vunpack.c.l.b16 %v902
        %v942 = vunpack.c.l.b16 %v903
        %v943 = vunpack.c.l.b16 %v904
        %v944 = vunpack.c.l.b16 %v905
        %v945 = vunpack.c.l.b16 %v906
        %v946 = vunpack.c.l.b16 %v907
        %v947 = vunpack.c.l.b16 %v908
        %v948 = vunpack.c.l.b16 %v909
        %v949 = vpack.c.b16 %v934, %v933
        %v950 = vpack.c.b16 %v936, %v935
        %v951 = vpack.c.b16 %v938, %v937
        %v952 = vpack.c.b16 %v940, %v939
        %v953 = vpack.c.b16 %v942, %v941
        %v954 = vpack.c.b16 %v944, %v943
        %v955 = vpack.c.b16 %v946, %v945
        %v956 = vpack.c.b16 %v948, %v947
        %965 = vmatprep.subr.bf16.mxu0 0
        %966 = vmatpush1.bf16.msra.mxu0 %v956
        %967 = vmatprep.subr.bf16.mxu0 0
        %968 = vmatpush1.bf16.msra.mxu0 %v955
        %969 = vmatprep.subr.bf16.mxu0 0
        %970 = vmatpush1.bf16.msra.mxu0 %v954
        %971 = vmatprep.subr.bf16.mxu0 0
        %972 = vmatpush1.bf16.msra.mxu0 %v953
        %973 = vmatprep.subr.bf16.mxu0 0
        %974 = vmatpush1.bf16.msra.mxu0 %v952
        %975 = vmatprep.subr.bf16.mxu0 0
        %976 = vmatpush1.bf16.msra.mxu0 %v951
        %977 = vmatprep.subr.bf16.mxu0 0
        %978 = vmatpush1.bf16.msra.mxu0 %v950
        %979 = vmatprep.subr.bf16.mxu0 0
        %980 = vmatpush1.bf16.msra.mxu0 %v949
        %981 = vmatprep.subr.bf16.mxu0 0
        %982 = vmatpush2.bf16.msra.mxu0 0
        %983 = vmatprep.subr.bf16.mxu0 0
        %984 = vmatpush2.bf16.msra.mxu0 0
        %985 = vmatprep.subr.bf16.mxu0 0
        %986 = vmatpush2.bf16.msra.mxu0 0
        %987 = vmatprep.subr.bf16.mxu0 0
        %988 = vmatpush2.bf16.msra.mxu0 0
        %989 = vmatprep.subr.bf16.mxu0 0
        %990 = vmatpush2.bf16.msra.mxu0 0
        %991 = vmatprep.subr.bf16.mxu0 0
        %992 = vmatpush2.bf16.msra.mxu0 0
        %993 = vmatprep.subr.bf16.mxu0 0
        %994 = vmatpush2.bf16.msra.mxu0 0
        %995 = vmatprep.subr.bf16.mxu0 0
        %996 = vmatpush2.bf16.msra.mxu0 0
        %997 = vmatprep.mubr.bf16.mxu0 0
        %998 = vmatmul.mubr.bf16.gmra.mxu0 %v886
        %v999 = vpop.f32.mrf.mxu0
        %v1000 = vadd.f32 %v915, %v999
        %v1001 = vpop.f32.mrf.mxu0
        %v1002 = vpop.f32.mrf.mxu0
        %v1003 = vadd.f32 %v915, %v1002
        %v1004 = vpop.f32.mrf.mxu0
        %1005 = vmatprep.mubr.bf16.mxu0 0
        %1006 = vmatmul.mubr.bf16.gmra.mxu0 %v887
        %v1007 = vpop.f32.mrf.mxu0
        %v1008 = vadd.f32 %v915, %v1007
        %v1009 = vpop.f32.mrf.mxu0
        %v1010 = vpop.f32.mrf.mxu0
        %v1011 = vadd.f32 %v915, %v1010
        %v1012 = vpop.f32.mrf.mxu0
        %1013 = vmatprep.mubr.bf16.mxu0 0
        %1014 = vmatmul.mubr.bf16.gmra.mxu0 %v888
        %v1015 = vpop.f32.mrf.mxu0
        %v1016 = vadd.f32 %v915, %v1015
        %v1017 = vpop.f32.mrf.mxu0
        %v1018 = vpop.f32.mrf.mxu0
        %v1019 = vadd.f32 %v915, %v1018
        %v1020 = vpop.f32.mrf.mxu0
        %1021 = vmatprep.mubr.bf16.mxu0 0
        %1022 = vmatmul.mubr.bf16.gmra.mxu0 %v889
        %v1023 = vpop.f32.mrf.mxu0
        %v1024 = vadd.f32 %v915, %v1023
        %v1025 = vpop.f32.mrf.mxu0
        %v1026 = vpop.f32.mrf.mxu0
        %v1027 = vadd.f32 %v915, %v1026
        %v1028 = vpop.f32.mrf.mxu0
        %1029 = vmatprep.mubr.bf16.mxu0 0
        %1030 = vmatmul.mubr.bf16.gmra.mxu0 %v890
        %v1031 = vpop.f32.mrf.mxu0
        %v1032 = vadd.f32 %v915, %v1031
        %v1033 = vpop.f32.mrf.mxu0
        %v1034 = vpop.f32.mrf.mxu0
        %v1035 = vadd.f32 %v915, %v1034
        %v1036 = vpop.f32.mrf.mxu0
        %1037 = vmatprep.mubr.bf16.mxu0 0
        %1038 = vmatmul.mubr.bf16.gmra.mxu0 %v891
        %v1039 = vpop.f32.mrf.mxu0
        %v1040 = vadd.f32 %v915, %v1039
        %v1041 = vpop.f32.mrf.mxu0
        %v1042 = vpop.f32.mrf.mxu0
        %v1043 = vadd.f32 %v915, %v1042
        %v1044 = vpop.f32.mrf.mxu0
        %1045 = vmatprep.mubr.bf16.mxu0 0
        %1046 = vmatmul.mubr.bf16.gmra.mxu0 %v892
        %v1047 = vpop.f32.mrf.mxu0
        %v1048 = vadd.f32 %v915, %v1047
        %v1049 = vpop.f32.mrf.mxu0
        %v1050 = vpop.f32.mrf.mxu0
        %v1051 = vadd.f32 %v915, %v1050
        %v1052 = vpop.f32.mrf.mxu0
        %1053 = vmatprep.mubr.bf16.mxu0 0
        %1054 = vmatmul.mubr.bf16.gmra.mxu0 %v893
        %v1055 = vpop.f32.mrf.mxu0
        %v1056 = vadd.f32 %v915, %v1055
        %v1057 = vpop.f32.mrf.mxu0
        %v1058 = vpop.f32.mrf.mxu0
        %v1059 = vadd.f32 %v915, %v1058
        %v1060 = vpop.f32.mrf.mxu0
        %1061 = vdwg.mxu0
        %v1062 = vmax.f32 %v1000, 0.0
        %v1063 = vmax.f32 %v1003, 0.0
        %v1064 = vmax.f32 %v1008, 0.0
        %v1065 = vmax.f32 %v1011, 0.0
        %v1066 = vmax.f32 %v1016, 0.0
        %v1067 = vmax.f32 %v1019, 0.0
        %v1068 = vmax.f32 %v1024, 0.0
        %v1069 = vmax.f32 %v1027, 0.0
        %v1070 = vmax.f32 %v1032, 0.0
        %v1071 = vmax.f32 %v1035, 0.0
        %v1072 = vmax.f32 %v1040, 0.0
        %v1073 = vmax.f32 %v1043, 0.0
        %v1074 = vmax.f32 %v1048, 0.0
        %v1075 = vmax.f32 %v1051, 0.0
        %v1076 = vmax.f32 %v1056, 0.0
        %v1077 = vmax.f32 %v1059, 0.0
        %v1078 = vpack.c.bf16 %v1063, %v1062
        %v1079 = vpack.c.bf16 %v1065, %v1064
        %v1080 = vpack.c.bf16 %v1067, %v1066
        %v1081 = vpack.c.bf16 %v1069, %v1068
        %v1082 = vpack.c.bf16 %v1071, %v1070
        %v1083 = vpack.c.bf16 %v1073, %v1072
        %v1084 = vpack.c.bf16 %v1075, %v1074
        %v1085 = vpack.c.bf16 %v1077, %v1076
        %v1086 = vld [vmem:[%s6] sm:$0xf]
        %v1087 = vld [vmem:[%s6 + $0x4] sm:$0xf]
        %v1088 = vld [vmem:[%s6 + $0x8] sm:$0xf]
        %v1089 = vld [vmem:[%s6 + $0xc] sm:$0xf]
        %v1090 = vld [vmem:[%s6 + $0x10] sm:$0xf]
        %v1091 = vld [vmem:[%s6 + $0x14] sm:$0xf]
        %v1092 = vld [vmem:[%s6 + $0x18] sm:$0xf]
        %v1093 = vld [vmem:[%s6 + $0x1c] sm:$0xf]
        %v1094 = vld [vmem:[%s6 + $0x20] sm:$0xf]
        %v1095 = vld [vmem:[%s6 + $0x24] sm:$0xf]
        %v1096 = vld [vmem:[%s6 + $0x28] sm:$0xf]
        %v1097 = vld [vmem:[%s6 + $0x2c] sm:$0xf]
        %v1098 = vld [vmem:[%s6 + $0x30] sm:$0xf]
        %v1099 = vld [vmem:[%s6 + $0x34] sm:$0xf]
        %v1100 = vld [vmem:[%s6 + $0x38] sm:$0xf]
        %v1101 = vld [vmem:[%s6 + $0x3c] sm:$0xf]
        %v1102 = vld [vmem:[%s7] sm:$0x1]
        %v1104 = vlaneseq
        %v1105 = vshrl.u32 %v1104, 7
        %v1106 = vsub.s32 0, %v1105
        %v1107 = vrot.slane %v1102, %v1106
        %v1125 = vunpack.c.l.b16 %v1086
        %v1126 = vunpack.c.l.b16 %v1087
        %v1127 = vunpack.c.l.b16 %v1088
        %v1128 = vunpack.c.l.b16 %v1089
        %v1129 = vunpack.c.l.b16 %v1090
        %v1130 = vunpack.c.l.b16 %v1091
        %v1131 = vunpack.c.l.b16 %v1092
        %v1132 = vunpack.c.l.b16 %v1093
        %v1133 = vunpack.c.l.b16 %v1094
        %v1134 = vunpack.c.l.b16 %v1095
        %v1135 = vunpack.c.l.b16 %v1096
        %v1136 = vunpack.c.l.b16 %v1097
        %v1137 = vunpack.c.l.b16 %v1098
        %v1138 = vunpack.c.l.b16 %v1099
        %v1139 = vunpack.c.l.b16 %v1100
        %v1140 = vunpack.c.l.b16 %v1101
        %v1141 = vpack.c.b16 %v1126, %v1125
        %v1142 = vpack.c.b16 %v1128, %v1127
        %v1143 = vpack.c.b16 %v1130, %v1129
        %v1144 = vpack.c.b16 %v1132, %v1131
        %v1145 = vpack.c.b16 %v1134, %v1133
        %v1146 = vpack.c.b16 %v1136, %v1135
        %v1147 = vpack.c.b16 %v1138, %v1137
        %v1148 = vpack.c.b16 %v1140, %v1139
        %1157 = vmatprep.subr.bf16.mxu0 0
        %1158 = vmatpush1.bf16.msra.mxu0 %v1148
        %1159 = vmatprep.subr.bf16.mxu0 0
        %1160 = vmatpush1.bf16.msra.mxu0 %v1147
        %1161 = vmatprep.subr.bf16.mxu0 0
        %1162 = vmatpush1.bf16.msra.mxu0 %v1146
        %1163 = vmatprep.subr.bf16.mxu0 0
        %1164 = vmatpush1.bf16.msra.mxu0 %v1145
        %1165 = vmatprep.subr.bf16.mxu0 0
        %1166 = vmatpush1.bf16.msra.mxu0 %v1144
        %1167 = vmatprep.subr.bf16.mxu0 0
        %1168 = vmatpush1.bf16.msra.mxu0 %v1143
        %1169 = vmatprep.subr.bf16.mxu0 0
        %1170 = vmatpush1.bf16.msra.mxu0 %v1142
        %1171 = vmatprep.subr.bf16.mxu0 0
        %1172 = vmatpush1.bf16.msra.mxu0 %v1141
        %1173 = vmatprep.subr.bf16.mxu0 0
        %1174 = vmatpush2.bf16.msra.mxu0 0
        %1175 = vmatprep.subr.bf16.mxu0 0
        %1176 = vmatpush2.bf16.msra.mxu0 0
        %1177 = vmatprep.subr.bf16.mxu0 0
        %1178 = vmatpush2.bf16.msra.mxu0 0
        %1179 = vmatprep.subr.bf16.mxu0 0
        %1180 = vmatpush2.bf16.msra.mxu0 0
        %1181 = vmatprep.subr.bf16.mxu0 0
        %1182 = vmatpush2.bf16.msra.mxu0 0
        %1183 = vmatprep.subr.bf16.mxu0 0
        %1184 = vmatpush2.bf16.msra.mxu0 0
        %1185 = vmatprep.subr.bf16.mxu0 0
        %1186 = vmatpush2.bf16.msra.mxu0 0
        %1187 = vmatprep.subr.bf16.mxu0 0
        %1188 = vmatpush2.bf16.msra.mxu0 0
        %1189 = vmatprep.mubr.bf16.mxu0 0
        %1190 = vmatmul.mubr.bf16.gmra.mxu0 %v1078
        %v1191 = vpop.f32.mrf.mxu0
        %v1192 = vadd.f32 %v1107, %v1191
        %v1193 = vpop.f32.mrf.mxu0
        %v1194 = vpop.f32.mrf.mxu0
        %v1195 = vadd.f32 %v1107, %v1194
        %v1196 = vpop.f32.mrf.mxu0
        %1197 = vmatprep.mubr.bf16.mxu0 0
        %1198 = vmatmul.mubr.bf16.gmra.mxu0 %v1079
        %v1199 = vpop.f32.mrf.mxu0
        %v1200 = vadd.f32 %v1107, %v1199
        %v1201 = vpop.f32.mrf.mxu0
        %v1202 = vpop.f32.mrf.mxu0
        %v1203 = vadd.f32 %v1107, %v1202
        %v1204 = vpop.f32.mrf.mxu0
        %1205 = vmatprep.mubr.bf16.mxu0 0
        %1206 = vmatmul.mubr.bf16.gmra.mxu0 %v1080
        %v1207 = vpop.f32.mrf.mxu0
        %v1208 = vadd.f32 %v1107, %v1207
        %v1209 = vpop.f32.mrf.mxu0
        %v1210 = vpop.f32.mrf.mxu0
        %v1211 = vadd.f32 %v1107, %v1210
        %v1212 = vpop.f32.mrf.mxu0
        %1213 = vmatprep.mubr.bf16.mxu0 0
        %1214 = vmatmul.mubr.bf16.gmra.mxu0 %v1081
        %v1215 = vpop.f32.mrf.mxu0
        %v1216 = vadd.f32 %v1107, %v1215
        %v1217 = vpop.f32.mrf.mxu0
        %v1218 = vpop.f32.mrf.mxu0
        %v1219 = vadd.f32 %v1107, %v1218
        %v1220 = vpop.f32.mrf.mxu0
        %1221 = vmatprep.mubr.bf16.mxu0 0
        %1222 = vmatmul.mubr.bf16.gmra.mxu0 %v1082
        %v1223 = vpop.f32.mrf.mxu0
        %v1224 = vadd.f32 %v1107, %v1223
        %v1225 = vpop.f32.mrf.mxu0
        %v1226 = vpop.f32.mrf.mxu0
        %v1227 = vadd.f32 %v1107, %v1226
        %v1228 = vpop.f32.mrf.mxu0
        %1229 = vmatprep.mubr.bf16.mxu0 0
        %1230 = vmatmul.mubr.bf16.gmra.mxu0 %v1083
        %v1231 = vpop.f32.mrf.mxu0
        %v1232 = vadd.f32 %v1107, %v1231
        %v1233 = vpop.f32.mrf.mxu0
        %v1234 = vpop.f32.mrf.mxu0
        %v1235 = vadd.f32 %v1107, %v1234
        %v1236 = vpop.f32.mrf.mxu0
        %1237 = vmatprep.mubr.bf16.mxu0 0
        %1238 = vmatmul.mubr.bf16.gmra.mxu0 %v1084
        %v1239 = vpop.f32.mrf.mxu0
        %v1240 = vadd.f32 %v1107, %v1239
        %v1241 = vpop.f32.mrf.mxu0
        %v1242 = vpop.f32.mrf.mxu0
        %v1243 = vadd.f32 %v1107, %v1242
        %v1244 = vpop.f32.mrf.mxu0
        %1245 = vmatprep.mubr.bf16.mxu0 0
        %1246 = vmatmul.mubr.bf16.gmra.mxu0 %v1085
        %v1247 = vpop.f32.mrf.mxu0
        %v1248 = vadd.f32 %v1107, %v1247
        %v1249 = vpop.f32.mrf.mxu0
        %v1250 = vpop.f32.mrf.mxu0
        %v1251 = vadd.f32 %v1107, %v1250
        %v1252 = vpop.f32.mrf.mxu0
        %1253 = vdwg.mxu0
        %v1254 = vmax.f32 %v1192, 0.0
        %v1255 = vmax.f32 %v1195, 0.0
        %v1256 = vmax.f32 %v1200, 0.0
        %v1257 = vmax.f32 %v1203, 0.0
        %v1258 = vmax.f32 %v1208, 0.0
        %v1259 = vmax.f32 %v1211, 0.0
        %v1260 = vmax.f32 %v1216, 0.0
        %v1261 = vmax.f32 %v1219, 0.0
        %v1262 = vmax.f32 %v1224, 0.0
        %v1263 = vmax.f32 %v1227, 0.0
        %v1264 = vmax.f32 %v1232, 0.0
        %v1265 = vmax.f32 %v1235, 0.0
        %v1266 = vmax.f32 %v1240, 0.0
        %v1267 = vmax.f32 %v1243, 0.0
        %v1268 = vmax.f32 %v1248, 0.0
        %v1269 = vmax.f32 %v1251, 0.0
        %v1270 = vld [vmem:[%s8] sm:$0x1]
        %v1272 = vlaneseq
        %v1273 = vshrl.u32 %v1272, 7
        %v1274 = vsub.s32 0, %v1273
        %v1275 = vrot.slane %v1270, %v1274
        %v1277 = vmul.f32 %v1254, %v1275
        %v1278 = vmul.f32 %v1255, %v1275
        %v1279 = vmul.f32 %v1256, %v1275
        %v1280 = vmul.f32 %v1257, %v1275
        %v1281 = vmul.f32 %v1258, %v1275
        %v1282 = vmul.f32 %v1259, %v1275
        %v1283 = vmul.f32 %v1260, %v1275
        %v1284 = vmul.f32 %v1261, %v1275
        %v1285 = vmul.f32 %v1262, %v1275
        %v1286 = vmul.f32 %v1263, %v1275
        %v1287 = vmul.f32 %v1264, %v1275
        %v1288 = vmul.f32 %v1265, %v1275
        %v1289 = vmul.f32 %v1266, %v1275
        %v1290 = vmul.f32 %v1267, %v1275
        %v1291 = vmul.f32 %v1268, %v1275
        %v1292 = vmul.f32 %v1269, %v1275
        %1293 = vadd.xlane.f32.xlu0 %v1277
        %v1294 = vpop.xlane.xlu0 %1293
        %1295 = vadd.xlane.f32.xlu0 %v1278
        %v1296 = vpop.xlane.xlu0 %1295
        %1297 = vadd.xlane.f32.xlu0 %v1279
        %v1298 = vpop.xlane.xlu0 %1297
        %1299 = vadd.xlane.f32.xlu0 %v1280
        %v1300 = vpop.xlane.xlu0 %1299
        %1301 = vadd.xlane.f32.xlu0 %v1281
        %v1302 = vpop.xlane.xlu0 %1301
        %1303 = vadd.xlane.f32.xlu0 %v1282
        %v1304 = vpop.xlane.xlu0 %1303
        %1305 = vadd.xlane.f32.xlu0 %v1283
        %v1306 = vpop.xlane.xlu0 %1305
        %1307 = vadd.xlane.f32.xlu0 %v1284
        %v1308 = vpop.xlane.xlu0 %1307
        %1309 = vadd.xlane.f32.xlu0 %v1285
        %v1310 = vpop.xlane.xlu0 %1309
        %1311 = vadd.xlane.f32.xlu0 %v1286
        %v1312 = vpop.xlane.xlu0 %1311
        %1313 = vadd.xlane.f32.xlu0 %v1287
        %v1314 = vpop.xlane.xlu0 %1313
        %1315 = vadd.xlane.f32.xlu0 %v1288
        %v1316 = vpop.xlane.xlu0 %1315
        %1317 = vadd.xlane.f32.xlu0 %v1289
        %v1318 = vpop.xlane.xlu0 %1317
        %1319 = vadd.xlane.f32.xlu0 %v1290
        %v1320 = vpop.xlane.xlu0 %1319
        %1321 = vadd.xlane.f32.xlu0 %v1291
        %v1322 = vpop.xlane.xlu0 %1321
        %1323 = vadd.xlane.f32.xlu0 %v1292
        %v1324 = vpop.xlane.xlu0 %1323
        %v1325 = vstv %s780
        %v1326 = vadd.f32 %v1294, %v1325
        %v1327 = vadd.f32 %v1296, %v1325
        %v1328 = vadd.f32 %v1298, %v1325
        %v1329 = vadd.f32 %v1300, %v1325
        %v1330 = vadd.f32 %v1302, %v1325
        %v1331 = vadd.f32 %v1304, %v1325
        %v1332 = vadd.f32 %v1306, %v1325
        %v1333 = vadd.f32 %v1308, %v1325
        %v1334 = vadd.f32 %v1310, %v1325
        %v1335 = vadd.f32 %v1312, %v1325
        %v1336 = vadd.f32 %v1314, %v1325
        %v1337 = vadd.f32 %v1316, %v1325
        %v1338 = vadd.f32 %v1318, %v1325
        %v1339 = vadd.f32 %v1320, %v1325
        %v1340 = vadd.f32 %v1322, %v1325
        %v1341 = vadd.f32 %v1324, %v1325
        %v1342 = vadd.f32 %v831, %v1326
        %v1343 = vadd.f32 %v832, %v1327
        %v1344 = vadd.f32 %v833, %v1328
        %v1345 = vadd.f32 %v834, %v1329
        %v1346 = vadd.f32 %v835, %v1330
        %v1347 = vadd.f32 %v836, %v1331
        %v1348 = vadd.f32 %v837, %v1332
        %v1349 = vadd.f32 %v838, %v1333
        %v1350 = vadd.f32 %v839, %v1334
        %v1351 = vadd.f32 %v840, %v1335
        %v1352 = vadd.f32 %v841, %v1336
        %v1353 = vadd.f32 %v842, %v1337
        %v1354 = vadd.f32 %v843, %v1338
        %v1355 = vadd.f32 %v844, %v1339
        %v1356 = vadd.f32 %v845, %v1340
        %v1357 = vadd.f32 %v846, %v1341
        %v1358 = vxor.u32 %v1342, 2147483648
        %v1359 = vxor.u32 %v1343, 2147483648
        %v1360 = vxor.u32 %v1344, 2147483648
        %v1361 = vxor.u32 %v1345, 2147483648
        %v1362 = vxor.u32 %v1346, 2147483648
        %v1363 = vxor.u32 %v1347, 2147483648
        %v1364 = vxor.u32 %v1348, 2147483648
        %v1365 = vxor.u32 %v1349, 2147483648
        %v1366 = vxor.u32 %v1350, 2147483648
        %v1367 = vxor.u32 %v1351, 2147483648
        %v1368 = vxor.u32 %v1352, 2147483648
        %v1369 = vxor.u32 %v1353, 2147483648
        %v1370 = vxor.u32 %v1354, 2147483648
        %v1371 = vxor.u32 %v1355, 2147483648
        %v1372 = vxor.u32 %v1356, 2147483648
        %v1373 = vxor.u32 %v1357, 2147483648
        %v1374 = vmul.f32 %v1358, 1.442695
        %v1375 = vpow.pop %v1374
        %v1376 = vmul.f32 %v1359, 1.442695
        %v1377 = vpow.pop %v1376
        %v1378 = vmul.f32 %v1360, 1.442695
        %v1379 = vpow.pop %v1378
        %v1380 = vmul.f32 %v1361, 1.442695
        %v1381 = vpow.pop %v1380
        %v1382 = vmul.f32 %v1362, 1.442695
        %v1383 = vpow.pop %v1382
        %v1384 = vmul.f32 %v1363, 1.442695
        %v1385 = vpow.pop %v1384
        %v1386 = vmul.f32 %v1364, 1.442695
        %v1387 = vpow.pop %v1386
        %v1388 = vmul.f32 %v1365, 1.442695
        %v1389 = vpow.pop %v1388
        %v1390 = vmul.f32 %v1366, 1.442695
        %v1391 = vpow.pop %v1390
        %v1392 = vmul.f32 %v1367, 1.442695
        %v1393 = vpow.pop %v1392
        %v1394 = vmul.f32 %v1368, 1.442695
        %v1395 = vpow.pop %v1394
        %v1396 = vmul.f32 %v1369, 1.442695
        %v1397 = vpow.pop %v1396
        %v1398 = vmul.f32 %v1370, 1.442695
        %v1399 = vpow.pop %v1398
        %v1400 = vmul.f32 %v1371, 1.442695
        %v1401 = vpow.pop %v1400
        %v1402 = vmul.f32 %v1372, 1.442695
        %v1403 = vpow.pop %v1402
        %v1404 = vmul.f32 %v1373, 1.442695
        %v1405 = vpow.pop %v1404
        %v1406 = vadd.f32 %v1375, 1.0
        %v1407 = vadd.f32 %v1377, 1.0
        %v1408 = vadd.f32 %v1379, 1.0
        %v1409 = vadd.f32 %v1381, 1.0
        %v1410 = vadd.f32 %v1383, 1.0
        %v1411 = vadd.f32 %v1385, 1.0
        %v1412 = vadd.f32 %v1387, 1.0
        %v1413 = vadd.f32 %v1389, 1.0
        %v1414 = vadd.f32 %v1391, 1.0
        %v1415 = vadd.f32 %v1393, 1.0
        %v1416 = vadd.f32 %v1395, 1.0
        %v1417 = vadd.f32 %v1397, 1.0
        %v1418 = vadd.f32 %v1399, 1.0
        %v1419 = vadd.f32 %v1401, 1.0
        %v1420 = vadd.f32 %v1403, 1.0
        %v1421 = vadd.f32 %v1405, 1.0
        %v1422 = vrcp.pop %v1406
        %v1423 = vmul.f32 1.0, %v1422
        %v1424 = vrcp.pop %v1407
        %v1425 = vmul.f32 1.0, %v1424
        %v1426 = vrcp.pop %v1408
        %v1427 = vmul.f32 1.0, %v1426
        %v1428 = vrcp.pop %v1409
        %v1429 = vmul.f32 1.0, %v1428
        %v1430 = vrcp.pop %v1410
        %v1431 = vmul.f32 1.0, %v1430
        %v1432 = vrcp.pop %v1411
        %v1433 = vmul.f32 1.0, %v1432
        %v1434 = vrcp.pop %v1412
        %v1435 = vmul.f32 1.0, %v1434
        %v1436 = vrcp.pop %v1413
        %v1437 = vmul.f32 1.0, %v1436
        %v1438 = vrcp.pop %v1414
        %v1439 = vmul.f32 1.0, %v1438
        %v1440 = vrcp.pop %v1415
        %v1441 = vmul.f32 1.0, %v1440
        %v1442 = vrcp.pop %v1416
        %v1443 = vmul.f32 1.0, %v1442
        %v1444 = vrcp.pop %v1417
        %v1445 = vmul.f32 1.0, %v1444
        %v1446 = vrcp.pop %v1418
        %v1447 = vmul.f32 1.0, %v1446
        %v1448 = vrcp.pop %v1419
        %v1449 = vmul.f32 1.0, %v1448
        %v1450 = vrcp.pop %v1420
        %v1451 = vmul.f32 1.0, %v1450
        %v1452 = vrcp.pop %v1421
        %v1453 = vmul.f32 1.0, %v1452
        %vm1454 = vcmask 7168
        %1455 = vst.msk [vmem:[%s397] sm:$0xff] %vm1454, %v1423
        %1456 = vst.msk [vmem:[%s397 + $0x8] sm:$0xff] %vm1454, %v1425
        %1457 = vst.msk [vmem:[%s397 + $0x10] sm:$0xff] %vm1454, %v1427
        %1458 = vst.msk [vmem:[%s397 + $0x18] sm:$0xff] %vm1454, %v1429
        %1459 = vst.msk [vmem:[%s397 + $0x20] sm:$0xff] %vm1454, %v1431
        %1460 = vst.msk [vmem:[%s397 + $0x28] sm:$0xff] %vm1454, %v1433
        %1461 = vst.msk [vmem:[%s397 + $0x30] sm:$0xff] %vm1454, %v1435
        %1462 = vst.msk [vmem:[%s397 + $0x38] sm:$0xff] %vm1454, %v1437
        %1463 = vst.msk [vmem:[%s397 + $0x40] sm:$0xff] %vm1454, %v1439
        %1464 = vst.msk [vmem:[%s397 + $0x48] sm:$0xff] %vm1454, %v1441
        %1465 = vst.msk [vmem:[%s397 + $0x50] sm:$0xff] %vm1454, %v1443
        %1466 = vst.msk [vmem:[%s397 + $0x58] sm:$0xff] %vm1454, %v1445
        %1467 = vst.msk [vmem:[%s397 + $0x60] sm:$0xff] %vm1454, %v1447
        %1468 = vst.msk [vmem:[%s397 + $0x68] sm:$0xff] %vm1454, %v1449
        %1469 = vst.msk [vmem:[%s397 + $0x70] sm:$0xff] %vm1454, %v1451
        %1470 = vst.msk [vmem:[%s397 + $0x78] sm:$0xff] %vm1454, %v1453
        %s1471 = smul.u32 16, %s22
        %p1472 = scmp.lt.s32.totalorder %s1471, 31
        %s1473 = scalar_select %p1472, %s1471, 31
        %s1474 = smul.addr %s1473, 8
        %s1475 = scalar_lea.vmem %s10, %s1474
        // Predicated region
        $region65: #{deepfm_forward.1} parent=59 // pred_check
          %p1476 = pneg %p260
        $region66: #{deepfm_forward.1} parent=59 // pred_check_branch
          %1478 = sbr.rel (%p1476) target = $region68
        $region67: #{deepfm_forward.1} parent=59 // pred_region
          %s1479 = smul.u32 16, %s22
        $region68: #{deepfm_forward.1} parent=59 // pred_fallthru
          _
      $region60: #{deepfm_forward.1} parent=5 // pred_fallthru
        _
      %p1480 = scmp.le.s32.totalorder 2, %s17
      // Predicated region
      $region69: #{deepfm_forward.1} parent=5 // pred_check
        %p1481 = pneg %p1480
      $region70: #{deepfm_forward.1} parent=5 // pred_check_branch
        %1483 = sbr.rel (%p1481) target = $region72
      $region71: #{deepfm_forward.1} parent=5 // pred_region
        %s1484 = ssub.s32 %s17, 2
        // Predicated region
        $region73: #{deepfm_forward.1} parent=71 // pred_check
          %p1485 = pneg %p266
        $region74: #{deepfm_forward.1} parent=71 // pred_check_branch
          %1487 = sbr.rel (%p1485) target = $region76
        $region75: #{deepfm_forward.1} parent=71 // pred_region
          %s1488 = smul.u32 16, %s23
          %p1489 = scmp.lt.s32.totalorder %s1488, 31
          %s1490 = scalar_select %p1489, %s1488, 31
          %s1491 = smul.addr %s1490, 8
          %s1492 = scalar_lea.vmem %s10, %s1491
        $region76: #{deepfm_forward.1} parent=71 // pred_fallthru
          _
      $region72: #{deepfm_forward.1} parent=5 // pred_fallthru
        _
    $region6: #{deepfm_forward.1} parent=1 // loop_footer
      %s21 = sadd.s32 1, %s17
    $region7: #{deepfm_forward.1} parent=1 // loop_footer_branch
      %16 = sbr.rel target = $region3
    $region8: #{deepfm_forward.1} parent=1 // loop_exit
      _
    %1493 = vsyncpa [#allocation3], 1
    %s1494 = scalar_lea.sflag [#allocation3], 1
    %1495 = vsyncpa %s1494, 1

</llo_original>
